<compile_context>
chip_gen: v5e
topology: v5e:2x2
jax: 0.10.0
libtpu: 0.0.40
codegen_flags: <defaults>
</compile_context>

<pallas_src>
import jax
import jax.numpy as jnp
from jax.experimental import pallas as pl
from jax.experimental.pallas import tpu as pltpu

LN_EPS = 1e-5
BN_EPS = 1e-5


def _layernorm(x, w, b, eps=LN_EPS):
    mu = jnp.mean(x, axis=-1, keepdims=True)
    var = jnp.mean((x - mu) ** 2, axis=-1, keepdims=True)
    return (x - mu) * jax.lax.rsqrt(var + eps) * w + b


# ----------------------------------------------------------------------------
# Fused kernel: transformer encoder layer + flatten + projector + sigmoid
# Grid: 1-D over tiles of the query rows (dataset batch); channels unrolled
# statically in-kernel (they are the per-channel independent attention problems).
# ----------------------------------------------------------------------------
def fused_encoder_classifier_kernel(
        xq_ref,        # (TQ, N*E) f32  query-row tile of the input
        xkv_ref,       # (S,  N*E) f32  full input rows (keys / values)
        wq_t_ref,      # (E, E)  bf16   q slice of in_proj.T, 1/sqrt(E) pre-folded
        wk_t_ref,      # (E, E)  bf16
        wv_t_ref,      # (E, E)  bf16
        bq_ref,        # (1, E)  f32    (pre-scaled)
        bk_ref,        # (1, E)  f32
        bv_ref,        # (1, E)  f32
        wo_t_ref,      # (E, E)  bf16   out_proj.weight.T
        bo_ref,        # (1, E)  f32
        ln1w_ref, ln1b_ref,   # (1, E) f32
        w1_t_ref,      # (E, 2E) bf16   linear1.weight.T
        b1_ref,        # (1, 2E) f32
        w2_t_ref,      # (2E, E) bf16   linear2.weight.T
        b2_ref,        # (1, E)  f32
        ln2w_ref, ln2b_ref,   # (1, E) f32
        pw1_t_ref,     # (N*E, 64) bf16  projector Linear(D,64).weight.T
        pb1_ref,       # (1, 64) f32
        bn_scale_ref,  # (1, 64) f32    gamma * rsqrt(running_var + eps)
        bn_shift_ref,  # (1, 64) f32    beta  - running_mean * scale
        pw2_row_ref,   # (1, 64) f32    projector Linear(64,1) weight row
        pb2_ref,       # (1, 1)  f32
        out_ref):      # (TQ, 1) f32    sigmoid probabilities
    f32, bf16 = jnp.float32, jnp.bfloat16
    E = wq_t_ref.shape[0]
    D = xq_ref.shape[1]
    N = D // E
    TQ = xq_ref.shape[0]
    H = pw1_t_ref.shape[1]

    xq_all = xq_ref[...].astype(f32)      # (TQ, N*E)
    xkv_all = xkv_ref[...].astype(f32)    # (S,  N*E)

    z = jnp.zeros((TQ, H), f32)           # projector pre-activation accumulator

    # Static unroll over channels (PyTorch's transformer "batch" axis). Each channel is
    # an independent single-head attention over the dataset-batch rows.
    for n in range(N):
        lo, hi = n * E, (n + 1) * E
        xq_n = xq_all[:, lo:hi]           # (TQ, E)
        xkv_n = xkv_all[:, lo:hi]         # (S, E)
        xq_bf = xq_n.astype(bf16)
        xkv_bf = xkv_n.astype(bf16)

        # --- single-head self attention (softmax scale folded into wq/bq) ---
        q = (jnp.dot(xq_bf, wq_t_ref[...], preferred_element_type=f32)
             + bq_ref[0]).astype(bf16)                              # (TQ, E)
        k = (jnp.dot(xkv_bf, wk_t_ref[...], preferred_element_type=f32)
             + bk_ref[0]).astype(bf16)                              # (S, E)
        v = (jnp.dot(xkv_bf, wv_t_ref[...], preferred_element_type=f32)
             + bv_ref[0]).astype(bf16)                              # (S, E)

        # TODO(synk): for very large S, additionally tile the key/value axis with an
        # online-softmax accumulator (flash-style) so scores stay O(TQ*TK) in VMEM.
        s = jax.lax.dot_general(q, k, (((1,), (1,)), ((), ())),
                                preferred_element_type=f32)         # (TQ, S)
        s = s - jnp.max(s, axis=-1, keepdims=True)
        p = jnp.exp(s)
        p = p * pl.reciprocal(jnp.sum(p, axis=-1, keepdims=True), approx=True)

        ctx = jnp.dot(p.astype(bf16), v, preferred_element_type=f32)   # (TQ, E)
        attn = jnp.dot(ctx.astype(bf16), wo_t_ref[...],
                       preferred_element_type=f32) + bo_ref[0]

        # --- residual + LN1, FFN (ReLU), residual + LN2 (all f32) ---
        h = _layernorm(xq_n + attn, ln1w_ref[0], ln1b_ref[0])
        ff = jnp.maximum(
            jnp.dot(h.astype(bf16), w1_t_ref[...], preferred_element_type=f32)
            + b1_ref[0], 0.0)
        ff = jnp.dot(ff.astype(bf16), w2_t_ref[...],
                     preferred_element_type=f32) + b2_ref[0]
        y = _layernorm(h + ff, ln2w_ref[0], ln2b_ref[0])            # (TQ, E)

        # --- projector Linear(N*E, 64): accumulate this channel's weight slab ---
        # (this replaces the (S,N,E) -> (S,N*E) reshape/transpose of the old version)
        z = z + jnp.dot(y.astype(bf16), pw1_t_ref[lo:hi, :],
                        preferred_element_type=f32)

    z = z + pb1_ref[0]
    z = z * bn_scale_ref[0] + bn_shift_ref[0]     # BatchNorm1d (eval), folded affine
    z = jnp.maximum(z, 0.0)
    # Linear(64, 1) as a VPU lane reduction (no 1-column MXU matmul)
    logit = jnp.sum(z * pw2_row_ref[0], axis=-1, keepdims=True) + pb2_ref[0]
    out_ref[...] = pl.reciprocal(1.0 + jnp.exp(-logit), approx=True)


# ----------------------------------------------------------------------------
# Wrapper: one pallas_call, grid over query-row tiles, host-side weight prep only
# ----------------------------------------------------------------------------
@jax.jit
def time_series_encoder_classifier(x_in, params):
    """x_in: (S=batch, N=input_channels, E=seq_length) -> (S, 1) sigmoid probabilities."""
    S, N, E = x_in.shape
    D = N * E
    f32, bf16 = jnp.float32, jnp.bfloat16

    # row-major flatten only (no transpose): channel n lives in lanes [n*E, (n+1)*E)
    x_flat = x_in.astype(f32).reshape(S, D)

    # ---- tiny host-side weight prep (fold scale / BN, split qkv, cast to bf16) ----
    wqkv_t = params['wqkv_t'].astype(f32)            # (E, 3E) = in_proj_weight.T
    bqkv = params['bqkv'].astype(f32)                # (1, 3E)
    scale = 1.0 / (float(E) ** 0.5)                  # softmax scale -> Q projection
    wq_t = (wqkv_t[:, :E] * scale).astype(bf16)
    wk_t = wqkv_t[:, E:2 * E].astype(bf16)
    wv_t = wqkv_t[:, 2 * E:].astype(bf16)
    bq = bqkv[:, :E] * scale
    bk = bqkv[:, E:2 * E]
    bv = bqkv[:, 2 * E:]

    bn_scale = params['bn_g'] * jax.lax.rsqrt(params['bn_v'] + BN_EPS)
    bn_shift = params['bn_b'] - params['bn_m'] * bn_scale
    pw2_row = params['pw2_t'].astype(f32).reshape(1, -1)   # (1, 64)

    TQ = min(S, 128)                       # query-row tile (fits all VMEM budgets)
    grid = (pl.cdiv(S, TQ),)

    def rep(shape):                        # full block, identical for every grid step
        return pl.BlockSpec(shape, lambda i: (0,) * len(shape))

    inputs = (
        x_flat,                            # query rows (tiled over the grid)
        x_flat,                            # full rows for keys / values
        wq_t, wk_t, wv_t, bq, bk, bv,
        params['wo_t'].astype(bf16), params['bo'],
        params['ln1w'], params['ln1b'],
        params['w1_t'].astype(bf16), params['b1'],
        params['w2_t'].astype(bf16), params['b2'],
        params['ln2w'], params['ln2b'],
        params['pw1_t'].astype(bf16), params['pb1'],
        bn_scale, bn_shift,
        pw2_row, params['pb2'],
    )
    in_specs = ([pl.BlockSpec((TQ, D), lambda i: (i, 0)),
                 rep((S, D))]
                + [rep(a.shape) for a in inputs[2:]])

    return pl.pallas_call(
        fused_encoder_classifier_kernel,
        out_shape=jax.ShapeDtypeStruct((S, 1), jnp.float32),
        grid=grid,
        in_specs=in_specs,
        out_specs=pl.BlockSpec((TQ, 1), lambda i: (i, 0)),
        compiler_params=pltpu.CompilerParams(
            dimension_semantics=("parallel",),        # q-tiles independent -> megacore
            vmem_limit_bytes=32 * 1024 * 1024),
    )(*inputs)


# ----------------------------------------------------------------------------
# Deterministic parameter construction (synthetic init, matches module shapes)
# ----------------------------------------------------------------------------
def make_params(key, input_channels, seq_length):
    E, C = seq_length, input_channels
    D = E * C
    ks = jax.random.split(key, 12)

    def rnd(k, shape, scale=0.1):
        return (scale * jax.random.normal(k, shape)).astype(jnp.float32)

    return dict(
        # transformer encoder layer (nhead=1)
        wqkv_t=rnd(ks[0], (E, 3 * E)),          # in_proj_weight.T
        bqkv=rnd(ks[1], (1, 3 * E), 0.02),
        wo_t=rnd(ks[2], (E, E)),                # out_proj.weight.T
        bo=rnd(ks[3], (1, E), 0.02),
        ln1w=jnp.ones((1, E), jnp.float32),
        ln1b=jnp.zeros((1, E), jnp.float32),
        w1_t=rnd(ks[4], (E, 2 * E)),            # linear1.weight.T
        b1=rnd(ks[5], (1, 2 * E), 0.02),
        w2_t=rnd(ks[6], (2 * E, E)),            # linear2.weight.T
        b2=rnd(ks[7], (1, E), 0.02),
        ln2w=jnp.ones((1, E), jnp.float32),
        ln2b=jnp.zeros((1, E), jnp.float32),
        # projector
        pw1_t=rnd(ks[8], (D, 64)),              # Linear(D,64).weight.T
        pb1=rnd(ks[9], (1, 64), 0.02),
        bn_g=jnp.ones((1, 64), jnp.float32),
        bn_b=jnp.zeros((1, 64), jnp.float32),
        bn_m=jnp.zeros((1, 64), jnp.float32),   # running_mean
        bn_v=jnp.ones((1, 64), jnp.float32),    # running_var
        pw2_t=rnd(ks[10], (64, 1)),             # Linear(64,1).weight.T
        pb2=rnd(ks[11], (1, 1), 0.02),
    )


# ----------------------------------------------------------------------------
# Pure-JAX f32 reference (mirrors PyTorch eval-mode forward) for a sanity check
# ----------------------------------------------------------------------------
def reference_forward(x_in, p):
    x = x_in.astype(jnp.float32)                      # (S, N, E)
    S, N, E = x.shape
    qkv = jnp.einsum('sne,ef->snf', x, p['wqkv_t']) + p['bqkv'][0]
    q, k, v = qkv[..., :E], qkv[..., E:2 * E], qkv[..., 2 * E:]
    scores = jnp.einsum('qne,kne->nqk', q, k) / jnp.sqrt(jnp.float32(E))
    attn = jax.nn.softmax(scores, axis=-1)
    ctx = jnp.einsum('nqk,kne->qne', attn, v)
    attn_out = jnp.einsum('sne,ef->snf', ctx, p['wo_t']) + p['bo'][0]
    h = _layernorm(x + attn_out, p['ln1w'][0], p['ln1b'][0])
    ff = jax.nn.relu(jnp.einsum('sne,ef->snf', h, p['w1_t']) + p['b1'][0])
    ff = jnp.einsum('snf,fe->sne', ff, p['w2_t']) + p['b2'][0]
    y = _layernorm(h + ff, p['ln2w'][0], p['ln2b'][0])
    hh = y.reshape(S, N * E)
    z = hh @ p['pw1_t'] + p['pb1'][0]
    z = (z - p['bn_m'][0]) * jax.lax.rsqrt(p['bn_v'][0] + BN_EPS) * p['bn_g'][0] \
        + p['bn_b'][0]
    z = jax.nn.relu(z)
    logit = z @ p['pw2_t'] + p['pb2'][0]
    return jax.nn.sigmoid(logit)


if __name__ == "__main__":
    batch, input_channels, seq_length = 8, 4, 16   # S, N, E
    key = jax.random.PRNGKey(0)
    k_x, k_p = jax.random.split(key)

    x_in = jax.random.normal(k_x, (batch, input_channels, seq_length),
                             dtype=jnp.float32)
    params = make_params(k_p, input_channels, seq_length)

    out = time_series_encoder_classifier(x_in, params)
    out = jax.block_until_ready(out)

    ref = reference_forward(x_in, params)
    assert out.shape == (batch, 1)
    # bf16 MXU operands + approx-reciprocal softmax/sigmoid -> compare loosely vs f32 ref
    assert jnp.allclose(out, ref, atol=1e-2, rtol=1e-2), (out, ref)

    print("KERNEL_OK")
</pallas_src>

<mosaic_0001>
module attributes {stable_mosaic.version = 11 : i64} {
  func.func @fused_encoder_classifier_kernel(%arg0: i32, %arg1: memref<8x64xf32, #tpu.memory_space<vmem>>, %arg2: memref<8x64xf32, #tpu.memory_space<vmem>>, %arg3: memref<16x16xbf16, #tpu.memory_space<vmem>>, %arg4: memref<16x16xbf16, #tpu.memory_space<vmem>>, %arg5: memref<16x16xbf16, #tpu.memory_space<vmem>>, %arg6: memref<1x16xf32, #tpu.memory_space<vmem>>, %arg7: memref<1x16xf32, #tpu.memory_space<vmem>>, %arg8: memref<1x16xf32, #tpu.memory_space<vmem>>, %arg9: memref<16x16xbf16, #tpu.memory_space<vmem>>, %arg10: memref<1x16xf32, #tpu.memory_space<vmem>>, %arg11: memref<1x16xf32, #tpu.memory_space<vmem>>, %arg12: memref<1x16xf32, #tpu.memory_space<vmem>>, %arg13: memref<16x32xbf16, #tpu.memory_space<vmem>>, %arg14: memref<1x32xf32, #tpu.memory_space<vmem>>, %arg15: memref<32x16xbf16, #tpu.memory_space<vmem>>, %arg16: memref<1x16xf32, #tpu.memory_space<vmem>>, %arg17: memref<1x16xf32, #tpu.memory_space<vmem>>, %arg18: memref<1x16xf32, #tpu.memory_space<vmem>>, %arg19: memref<64x64xbf16, #tpu.memory_space<vmem>>, %arg20: memref<1x64xf32, #tpu.memory_space<vmem>>, %arg21: memref<1x64xf32, #tpu.memory_space<vmem>>, %arg22: memref<1x64xf32, #tpu.memory_space<vmem>>, %arg23: memref<1x64xf32, #tpu.memory_space<vmem>>, %arg24: memref<1x1xf32, #tpu.memory_space<vmem>>, %arg25: memref<8x1xf32, #tpu.memory_space<vmem>>) attributes {dimension_semantics = [#tpu.dimension_semantics<parallel>], iteration_bounds = array<i64: 1>, scalar_prefetch = 0 : i64, scratch_operands = 0 : i64, tpu.core_type = #tpu.core_type<tc>, window_params = [{transform_indices = @transform_0, window_bounds = array<i64: 8, 64>}, {pipeline_mode = #tpu.pipeline_mode<synchronous>, transform_indices = @transform_1, window_bounds = array<i64: 8, 64>}, {pipeline_mode = #tpu.pipeline_mode<synchronous>, transform_indices = @transform_2, window_bounds = array<i64: 16, 16>}, {pipeline_mode = #tpu.pipeline_mode<synchronous>, transform_indices = @transform_3, window_bounds = array<i64: 16, 16>}, {pipeline_mode = #tpu.pipeline_mode<synchronous>, transform_indices = @transform_4, window_bounds = array<i64: 16, 16>}, {pipeline_mode = #tpu.pipeline_mode<synchronous>, transform_indices = @transform_5, window_bounds = array<i64: 1, 16>}, {pipeline_mode = #tpu.pipeline_mode<synchronous>, transform_indices = @transform_6, window_bounds = array<i64: 1, 16>}, {pipeline_mode = #tpu.pipeline_mode<synchronous>, transform_indices = @transform_7, window_bounds = array<i64: 1, 16>}, {pipeline_mode = #tpu.pipeline_mode<synchronous>, transform_indices = @transform_8, window_bounds = array<i64: 16, 16>}, {pipeline_mode = #tpu.pipeline_mode<synchronous>, transform_indices = @transform_9, window_bounds = array<i64: 1, 16>}, {pipeline_mode = #tpu.pipeline_mode<synchronous>, transform_indices = @transform_10, window_bounds = array<i64: 1, 16>}, {pipeline_mode = #tpu.pipeline_mode<synchronous>, transform_indices = @transform_11, window_bounds = array<i64: 1, 16>}, {pipeline_mode = #tpu.pipeline_mode<synchronous>, transform_indices = @transform_12, window_bounds = array<i64: 16, 32>}, {pipeline_mode = #tpu.pipeline_mode<synchronous>, transform_indices = @transform_13, window_bounds = array<i64: 1, 32>}, {pipeline_mode = #tpu.pipeline_mode<synchronous>, transform_indices = @transform_14, window_bounds = array<i64: 32, 16>}, {pipeline_mode = #tpu.pipeline_mode<synchronous>, transform_indices = @transform_15, window_bounds = array<i64: 1, 16>}, {pipeline_mode = #tpu.pipeline_mode<synchronous>, transform_indices = @transform_16, window_bounds = array<i64: 1, 16>}, {pipeline_mode = #tpu.pipeline_mode<synchronous>, transform_indices = @transform_17, window_bounds = array<i64: 1, 16>}, {pipeline_mode = #tpu.pipeline_mode<synchronous>, transform_indices = @transform_18, window_bounds = array<i64: 64, 64>}, {pipeline_mode = #tpu.pipeline_mode<synchronous>, transform_indices = @transform_19, window_bounds = array<i64: 1, 64>}, {pipeline_mode = #tpu.pipeline_mode<synchronous>, transform_indices = @transform_20, window_bounds = array<i64: 1, 64>}, {pipeline_mode = #tpu.pipeline_mode<synchronous>, transform_indices = @transform_21, window_bounds = array<i64: 1, 64>}, {pipeline_mode = #tpu.pipeline_mode<synchronous>, transform_indices = @transform_22, window_bounds = array<i64: 1, 64>}, {pipeline_mode = #tpu.pipeline_mode<synchronous>, transform_indices = @transform_23, window_bounds = array<i64: 1, 1>}, {transform_indices = @transform_24, window_bounds = array<i64: 8, 1>}]} {
    %c0 = arith.constant 0 : index
    %c0_0 = arith.constant 0 : index
    %0 = vector.load %arg1[%c0, %c0_0] : memref<8x64xf32, #tpu.memory_space<vmem>>, vector<8x64xf32>
    %c0_1 = arith.constant 0 : index
    %c0_2 = arith.constant 0 : index
    %1 = vector.load %arg2[%c0_1, %c0_2] : memref<8x64xf32, #tpu.memory_space<vmem>>, vector<8x64xf32>
    %cst = arith.constant 0.000000e+00 : f32
    %2 = vector.broadcast %cst : f32 to vector<8x64xf32>
    %3 = vector.extract_strided_slice %0 {offsets = [0, 0], sizes = [8, 16], strides = [1, 1]} : vector<8x64xf32> to vector<8x16xf32>
    %4 = vector.extract_strided_slice %1 {offsets = [0, 0], sizes = [8, 16], strides = [1, 1]} : vector<8x64xf32> to vector<8x16xf32>
    %5 = arith.truncf %3 : vector<8x16xf32> to vector<8x16xbf16>
    %6 = arith.truncf %4 : vector<8x16xf32> to vector<8x16xbf16>
    %c0_3 = arith.constant 0 : index
    %c0_4 = arith.constant 0 : index
    %7 = vector.load %arg3[%c0_3, %c0_4] : memref<16x16xbf16, #tpu.memory_space<vmem>>, vector<16x16xbf16>
    %cst_5 = arith.constant dense<0.000000e+00> : vector<8x16xf32>
    %8 = tpu.matmul %5, %7, %cst_5 {dimension_numbers = #tpu.dot_dimension_numbers<[1], [0], [0], [1], [0, 0, 1, 1], [], []>} : vector<8x16xbf16>, vector<16x16xbf16>, vector<8x16xf32> -> vector<8x16xf32>
    %c0_6 = arith.constant 0 : index
    %c0_7 = arith.constant 0 : index
    %9 = vector.load %arg6[%c0_6, %c0_7] : memref<1x16xf32, #tpu.memory_space<vmem>>, vector<1x16xf32>
    %10 = vector.shape_cast %9 : vector<1x16xf32> to vector<16xf32>
    %11 = vector.shape_cast %10 : vector<16xf32> to vector<1x16xf32>
    %12 = vector.broadcast %11 : vector<1x16xf32> to vector<8x16xf32>
    %13 = arith.addf %8, %12 : vector<8x16xf32>
    %14 = arith.truncf %13 : vector<8x16xf32> to vector<8x16xbf16>
    %c0_8 = arith.constant 0 : index
    %c0_9 = arith.constant 0 : index
    %15 = vector.load %arg4[%c0_8, %c0_9] : memref<16x16xbf16, #tpu.memory_space<vmem>>, vector<16x16xbf16>
    %cst_10 = arith.constant dense<0.000000e+00> : vector<8x16xf32>
    %16 = tpu.matmul %6, %15, %cst_10 {dimension_numbers = #tpu.dot_dimension_numbers<[1], [0], [0], [1], [0, 0, 1, 1], [], []>} : vector<8x16xbf16>, vector<16x16xbf16>, vector<8x16xf32> -> vector<8x16xf32>
    %c0_11 = arith.constant 0 : index
    %c0_12 = arith.constant 0 : index
    %17 = vector.load %arg7[%c0_11, %c0_12] : memref<1x16xf32, #tpu.memory_space<vmem>>, vector<1x16xf32>
    %18 = vector.shape_cast %17 : vector<1x16xf32> to vector<16xf32>
    %19 = vector.shape_cast %18 : vector<16xf32> to vector<1x16xf32>
    %20 = vector.broadcast %19 : vector<1x16xf32> to vector<8x16xf32>
    %21 = arith.addf %16, %20 : vector<8x16xf32>
    %22 = arith.truncf %21 : vector<8x16xf32> to vector<8x16xbf16>
    %c0_13 = arith.constant 0 : index
    %c0_14 = arith.constant 0 : index
    %23 = vector.load %arg5[%c0_13, %c0_14] : memref<16x16xbf16, #tpu.memory_space<vmem>>, vector<16x16xbf16>
    %cst_15 = arith.constant dense<0.000000e+00> : vector<8x16xf32>
    %24 = tpu.matmul %6, %23, %cst_15 {dimension_numbers = #tpu.dot_dimension_numbers<[1], [0], [0], [1], [0, 0, 1, 1], [], []>} : vector<8x16xbf16>, vector<16x16xbf16>, vector<8x16xf32> -> vector<8x16xf32>
    %c0_16 = arith.constant 0 : index
    %c0_17 = arith.constant 0 : index
    %25 = vector.load %arg8[%c0_16, %c0_17] : memref<1x16xf32, #tpu.memory_space<vmem>>, vector<1x16xf32>
    %26 = vector.shape_cast %25 : vector<1x16xf32> to vector<16xf32>
    %27 = vector.shape_cast %26 : vector<16xf32> to vector<1x16xf32>
    %28 = vector.broadcast %27 : vector<1x16xf32> to vector<8x16xf32>
    %29 = arith.addf %24, %28 : vector<8x16xf32>
    %30 = arith.truncf %29 : vector<8x16xf32> to vector<8x16xbf16>
    %cst_18 = arith.constant dense<0.000000e+00> : vector<8x8xf32>
    %31 = tpu.matmul %14, %22, %cst_18 {dimension_numbers = #tpu.dot_dimension_numbers<[1], [1], [0], [0], [0, 0, 1, 0], [], []>} : vector<8x16xbf16>, vector<8x16xbf16>, vector<8x8xf32> -> vector<8x8xf32>
    %cst_19 = arith.constant dense<0xFF800000> : vector<8xf32>
    %32 = vector.multi_reduction <maximumf>, %31, %cst_19 [1] : vector<8x8xf32> to vector<8xf32>
    %33 = vector.shape_cast %32 : vector<8xf32> to vector<8x1xf32>
    %34 = vector.broadcast %33 : vector<8x1xf32> to vector<8x8xf32>
    %35 = arith.subf %31, %34 : vector<8x8xf32>
    %36 = math.exp %35 : vector<8x8xf32>
    %cst_20 = arith.constant dense<0.000000e+00> : vector<8xf32>
    %37 = vector.multi_reduction <add>, %36, %cst_20 [1] : vector<8x8xf32> to vector<8xf32>
    %38 = vector.shape_cast %37 : vector<8xf32> to vector<8x1xf32>
    %39 = tpu.reciprocal %38 {approx = true} : vector<8x1xf32> -> vector<8x1xf32>
    %40 = vector.broadcast %39 : vector<8x1xf32> to vector<8x8xf32>
    %41 = arith.mulf %36, %40 : vector<8x8xf32>
    %42 = arith.truncf %41 : vector<8x8xf32> to vector<8x8xbf16>
    %cst_21 = arith.constant dense<0.000000e+00> : vector<8x16xf32>
    %43 = tpu.matmul %42, %30, %cst_21 {dimension_numbers = #tpu.dot_dimension_numbers<[1], [0], [0], [1], [0, 0, 1, 1], [], []>} : vector<8x8xbf16>, vector<8x16xbf16>, vector<8x16xf32> -> vector<8x16xf32>
    %44 = arith.truncf %43 : vector<8x16xf32> to vector<8x16xbf16>
    %c0_22 = arith.constant 0 : index
    %c0_23 = arith.constant 0 : index
    %45 = vector.load %arg9[%c0_22, %c0_23] : memref<16x16xbf16, #tpu.memory_space<vmem>>, vector<16x16xbf16>
    %cst_24 = arith.constant dense<0.000000e+00> : vector<8x16xf32>
    %46 = tpu.matmul %44, %45, %cst_24 {dimension_numbers = #tpu.dot_dimension_numbers<[1], [0], [0], [1], [0, 0, 1, 1], [], []>} : vector<8x16xbf16>, vector<16x16xbf16>, vector<8x16xf32> -> vector<8x16xf32>
    %c0_25 = arith.constant 0 : index
    %c0_26 = arith.constant 0 : index
    %47 = vector.load %arg10[%c0_25, %c0_26] : memref<1x16xf32, #tpu.memory_space<vmem>>, vector<1x16xf32>
    %48 = vector.shape_cast %47 : vector<1x16xf32> to vector<16xf32>
    %49 = vector.shape_cast %48 : vector<16xf32> to vector<1x16xf32>
    %50 = vector.broadcast %49 : vector<1x16xf32> to vector<8x16xf32>
    %51 = arith.addf %46, %50 : vector<8x16xf32>
    %52 = arith.addf %3, %51 : vector<8x16xf32>
    %c0_27 = arith.constant 0 : index
    %c0_28 = arith.constant 0 : index
    %53 = vector.load %arg11[%c0_27, %c0_28] : memref<1x16xf32, #tpu.memory_space<vmem>>, vector<1x16xf32>
    %54 = vector.shape_cast %53 : vector<1x16xf32> to vector<16xf32>
    %c0_29 = arith.constant 0 : index
    %c0_30 = arith.constant 0 : index
    %55 = vector.load %arg12[%c0_29, %c0_30] : memref<1x16xf32, #tpu.memory_space<vmem>>, vector<1x16xf32>
    %56 = vector.shape_cast %55 : vector<1x16xf32> to vector<16xf32>
    %cst_31 = arith.constant dense<0.000000e+00> : vector<8xf32>
    %57 = vector.multi_reduction <add>, %52, %cst_31 [1] : vector<8x16xf32> to vector<8xf32>
    %58 = vector.shape_cast %57 : vector<8xf32> to vector<8x1xf32>
    %cst_32 = arith.constant 1.600000e+01 : f32
    %59 = vector.broadcast %cst_32 : f32 to vector<8x1xf32>
    %60 = arith.divf %58, %59 : vector<8x1xf32>
    %61 = vector.broadcast %60 : vector<8x1xf32> to vector<8x16xf32>
    %62 = arith.subf %52, %61 : vector<8x16xf32>
    %63 = arith.mulf %62, %62 : vector<8x16xf32>
    %cst_33 = arith.constant dense<0.000000e+00> : vector<8xf32>
    %64 = vector.multi_reduction <add>, %63, %cst_33 [1] : vector<8x16xf32> to vector<8xf32>
    %65 = vector.shape_cast %64 : vector<8xf32> to vector<8x1xf32>
    %cst_34 = arith.constant 1.600000e+01 : f32
    %66 = vector.broadcast %cst_34 : f32 to vector<8x1xf32>
    %67 = arith.divf %65, %66 : vector<8x1xf32>
    %68 = vector.broadcast %60 : vector<8x1xf32> to vector<8x16xf32>
    %69 = arith.subf %52, %68 : vector<8x16xf32>
    %cst_35 = arith.constant 9.99999974E-6 : f32
    %70 = vector.broadcast %cst_35 : f32 to vector<8x1xf32>
    %71 = arith.addf %67, %70 : vector<8x1xf32>
    %72 = math.rsqrt %71 : vector<8x1xf32>
    %73 = vector.broadcast %72 : vector<8x1xf32> to vector<8x16xf32>
    %74 = arith.mulf %69, %73 : vector<8x16xf32>
    %75 = vector.shape_cast %54 : vector<16xf32> to vector<1x16xf32>
    %76 = vector.broadcast %75 : vector<1x16xf32> to vector<8x16xf32>
    %77 = arith.mulf %74, %76 : vector<8x16xf32>
    %78 = vector.shape_cast %56 : vector<16xf32> to vector<1x16xf32>
    %79 = vector.broadcast %78 : vector<1x16xf32> to vector<8x16xf32>
    %80 = arith.addf %77, %79 : vector<8x16xf32>
    %81 = arith.truncf %80 : vector<8x16xf32> to vector<8x16xbf16>
    %c0_36 = arith.constant 0 : index
    %c0_37 = arith.constant 0 : index
    %82 = vector.load %arg13[%c0_36, %c0_37] : memref<16x32xbf16, #tpu.memory_space<vmem>>, vector<16x32xbf16>
    %cst_38 = arith.constant dense<0.000000e+00> : vector<8x32xf32>
    %83 = tpu.matmul %81, %82, %cst_38 {dimension_numbers = #tpu.dot_dimension_numbers<[1], [0], [0], [1], [0, 0, 1, 1], [], []>} : vector<8x16xbf16>, vector<16x32xbf16>, vector<8x32xf32> -> vector<8x32xf32>
    %c0_39 = arith.constant 0 : index
    %c0_40 = arith.constant 0 : index
    %84 = vector.load %arg14[%c0_39, %c0_40] : memref<1x32xf32, #tpu.memory_space<vmem>>, vector<1x32xf32>
    %85 = vector.shape_cast %84 : vector<1x32xf32> to vector<32xf32>
    %86 = vector.shape_cast %85 : vector<32xf32> to vector<1x32xf32>
    %87 = vector.broadcast %86 : vector<1x32xf32> to vector<8x32xf32>
    %88 = arith.addf %83, %87 : vector<8x32xf32>
    %cst_41 = arith.constant 0.000000e+00 : f32
    %89 = vector.broadcast %cst_41 : f32 to vector<8x32xf32>
    %90 = arith.maximumf %88, %89 : vector<8x32xf32>
    %91 = arith.truncf %90 : vector<8x32xf32> to vector<8x32xbf16>
    %c0_42 = arith.constant 0 : index
    %c0_43 = arith.constant 0 : index
    %92 = vector.load %arg15[%c0_42, %c0_43] : memref<32x16xbf16, #tpu.memory_space<vmem>>, vector<32x16xbf16>
    %cst_44 = arith.constant dense<0.000000e+00> : vector<8x16xf32>
    %93 = tpu.matmul %91, %92, %cst_44 {dimension_numbers = #tpu.dot_dimension_numbers<[1], [0], [0], [1], [0, 0, 1, 1], [], []>} : vector<8x32xbf16>, vector<32x16xbf16>, vector<8x16xf32> -> vector<8x16xf32>
    %c0_45 = arith.constant 0 : index
    %c0_46 = arith.constant 0 : index
    %94 = vector.load %arg16[%c0_45, %c0_46] : memref<1x16xf32, #tpu.memory_space<vmem>>, vector<1x16xf32>
    %95 = vector.shape_cast %94 : vector<1x16xf32> to vector<16xf32>
    %96 = vector.shape_cast %95 : vector<16xf32> to vector<1x16xf32>
    %97 = vector.broadcast %96 : vector<1x16xf32> to vector<8x16xf32>
    %98 = arith.addf %93, %97 : vector<8x16xf32>
    %99 = arith.addf %80, %98 : vector<8x16xf32>
    %c0_47 = arith.constant 0 : index
    %c0_48 = arith.constant 0 : index
    %100 = vector.load %arg17[%c0_47, %c0_48] : memref<1x16xf32, #tpu.memory_space<vmem>>, vector<1x16xf32>
    %101 = vector.shape_cast %100 : vector<1x16xf32> to vector<16xf32>
    %c0_49 = arith.constant 0 : index
    %c0_50 = arith.constant 0 : index
    %102 = vector.load %arg18[%c0_49, %c0_50] : memref<1x16xf32, #tpu.memory_space<vmem>>, vector<1x16xf32>
    %103 = vector.shape_cast %102 : vector<1x16xf32> to vector<16xf32>
    %cst_51 = arith.constant dense<0.000000e+00> : vector<8xf32>
    %104 = vector.multi_reduction <add>, %99, %cst_51 [1] : vector<8x16xf32> to vector<8xf32>
    %105 = vector.shape_cast %104 : vector<8xf32> to vector<8x1xf32>
    %cst_52 = arith.constant 1.600000e+01 : f32
    %106 = vector.broadcast %cst_52 : f32 to vector<8x1xf32>
    %107 = arith.divf %105, %106 : vector<8x1xf32>
    %108 = vector.broadcast %107 : vector<8x1xf32> to vector<8x16xf32>
    %109 = arith.subf %99, %108 : vector<8x16xf32>
    %110 = arith.mulf %109, %109 : vector<8x16xf32>
    %cst_53 = arith.constant dense<0.000000e+00> : vector<8xf32>
    %111 = vector.multi_reduction <add>, %110, %cst_53 [1] : vector<8x16xf32> to vector<8xf32>
    %112 = vector.shape_cast %111 : vector<8xf32> to vector<8x1xf32>
    %cst_54 = arith.constant 1.600000e+01 : f32
    %113 = vector.broadcast %cst_54 : f32 to vector<8x1xf32>
    %114 = arith.divf %112, %113 : vector<8x1xf32>
    %115 = vector.broadcast %107 : vector<8x1xf32> to vector<8x16xf32>
    %116 = arith.subf %99, %115 : vector<8x16xf32>
    %cst_55 = arith.constant 9.99999974E-6 : f32
    %117 = vector.broadcast %cst_55 : f32 to vector<8x1xf32>
    %118 = arith.addf %114, %117 : vector<8x1xf32>
    %119 = math.rsqrt %118 : vector<8x1xf32>
    %120 = vector.broadcast %119 : vector<8x1xf32> to vector<8x16xf32>
    %121 = arith.mulf %116, %120 : vector<8x16xf32>
    %122 = vector.shape_cast %101 : vector<16xf32> to vector<1x16xf32>
    %123 = vector.broadcast %122 : vector<1x16xf32> to vector<8x16xf32>
    %124 = arith.mulf %121, %123 : vector<8x16xf32>
    %125 = vector.shape_cast %103 : vector<16xf32> to vector<1x16xf32>
    %126 = vector.broadcast %125 : vector<1x16xf32> to vector<8x16xf32>
    %127 = arith.addf %124, %126 : vector<8x16xf32>
    %128 = arith.truncf %127 : vector<8x16xf32> to vector<8x16xbf16>
    %c0_56 = arith.constant 0 : index
    %c0_57 = arith.constant 0 : index
    %129 = vector.load %arg19[%c0_56, %c0_57] : memref<64x64xbf16, #tpu.memory_space<vmem>>, vector<16x64xbf16>
    %cst_58 = arith.constant dense<0.000000e+00> : vector<8x64xf32>
    %130 = tpu.matmul %128, %129, %cst_58 {dimension_numbers = #tpu.dot_dimension_numbers<[1], [0], [0], [1], [0, 0, 1, 1], [], []>} : vector<8x16xbf16>, vector<16x64xbf16>, vector<8x64xf32> -> vector<8x64xf32>
    %131 = arith.addf %2, %130 : vector<8x64xf32>
    %132 = vector.extract_strided_slice %0 {offsets = [0, 16], sizes = [8, 16], strides = [1, 1]} : vector<8x64xf32> to vector<8x16xf32>
    %133 = vector.extract_strided_slice %1 {offsets = [0, 16], sizes = [8, 16], strides = [1, 1]} : vector<8x64xf32> to vector<8x16xf32>
    %134 = arith.truncf %132 : vector<8x16xf32> to vector<8x16xbf16>
    %135 = arith.truncf %133 : vector<8x16xf32> to vector<8x16xbf16>
    %c0_59 = arith.constant 0 : index
    %c0_60 = arith.constant 0 : index
    %136 = vector.load %arg3[%c0_59, %c0_60] : memref<16x16xbf16, #tpu.memory_space<vmem>>, vector<16x16xbf16>
    %cst_61 = arith.constant dense<0.000000e+00> : vector<8x16xf32>
    %137 = tpu.matmul %134, %136, %cst_61 {dimension_numbers = #tpu.dot_dimension_numbers<[1], [0], [0], [1], [0, 0, 1, 1], [], []>} : vector<8x16xbf16>, vector<16x16xbf16>, vector<8x16xf32> -> vector<8x16xf32>
    %c0_62 = arith.constant 0 : index
    %c0_63 = arith.constant 0 : index
    %138 = vector.load %arg6[%c0_62, %c0_63] : memref<1x16xf32, #tpu.memory_space<vmem>>, vector<1x16xf32>
    %139 = vector.shape_cast %138 : vector<1x16xf32> to vector<16xf32>
    %140 = vector.shape_cast %139 : vector<16xf32> to vector<1x16xf32>
    %141 = vector.broadcast %140 : vector<1x16xf32> to vector<8x16xf32>
    %142 = arith.addf %137, %141 : vector<8x16xf32>
    %143 = arith.truncf %142 : vector<8x16xf32> to vector<8x16xbf16>
    %c0_64 = arith.constant 0 : index
    %c0_65 = arith.constant 0 : index
    %144 = vector.load %arg4[%c0_64, %c0_65] : memref<16x16xbf16, #tpu.memory_space<vmem>>, vector<16x16xbf16>
    %cst_66 = arith.constant dense<0.000000e+00> : vector<8x16xf32>
    %145 = tpu.matmul %135, %144, %cst_66 {dimension_numbers = #tpu.dot_dimension_numbers<[1], [0], [0], [1], [0, 0, 1, 1], [], []>} : vector<8x16xbf16>, vector<16x16xbf16>, vector<8x16xf32> -> vector<8x16xf32>
    %c0_67 = arith.constant 0 : index
    %c0_68 = arith.constant 0 : index
    %146 = vector.load %arg7[%c0_67, %c0_68] : memref<1x16xf32, #tpu.memory_space<vmem>>, vector<1x16xf32>
    %147 = vector.shape_cast %146 : vector<1x16xf32> to vector<16xf32>
    %148 = vector.shape_cast %147 : vector<16xf32> to vector<1x16xf32>
    %149 = vector.broadcast %148 : vector<1x16xf32> to vector<8x16xf32>
    %150 = arith.addf %145, %149 : vector<8x16xf32>
    %151 = arith.truncf %150 : vector<8x16xf32> to vector<8x16xbf16>
    %c0_69 = arith.constant 0 : index
    %c0_70 = arith.constant 0 : index
    %152 = vector.load %arg5[%c0_69, %c0_70] : memref<16x16xbf16, #tpu.memory_space<vmem>>, vector<16x16xbf16>
    %cst_71 = arith.constant dense<0.000000e+00> : vector<8x16xf32>
    %153 = tpu.matmul %135, %152, %cst_71 {dimension_numbers = #tpu.dot_dimension_numbers<[1], [0], [0], [1], [0, 0, 1, 1], [], []>} : vector<8x16xbf16>, vector<16x16xbf16>, vector<8x16xf32> -> vector<8x16xf32>
    %c0_72 = arith.constant 0 : index
    %c0_73 = arith.constant 0 : index
    %154 = vector.load %arg8[%c0_72, %c0_73] : memref<1x16xf32, #tpu.memory_space<vmem>>, vector<1x16xf32>
    %155 = vector.shape_cast %154 : vector<1x16xf32> to vector<16xf32>
    %156 = vector.shape_cast %155 : vector<16xf32> to vector<1x16xf32>
    %157 = vector.broadcast %156 : vector<1x16xf32> to vector<8x16xf32>
    %158 = arith.addf %153, %157 : vector<8x16xf32>
    %159 = arith.truncf %158 : vector<8x16xf32> to vector<8x16xbf16>
    %cst_74 = arith.constant dense<0.000000e+00> : vector<8x8xf32>
    %160 = tpu.matmul %143, %151, %cst_74 {dimension_numbers = #tpu.dot_dimension_numbers<[1], [1], [0], [0], [0, 0, 1, 0], [], []>} : vector<8x16xbf16>, vector<8x16xbf16>, vector<8x8xf32> -> vector<8x8xf32>
    %cst_75 = arith.constant dense<0xFF800000> : vector<8xf32>
    %161 = vector.multi_reduction <maximumf>, %160, %cst_75 [1] : vector<8x8xf32> to vector<8xf32>
    %162 = vector.shape_cast %161 : vector<8xf32> to vector<8x1xf32>
    %163 = vector.broadcast %162 : vector<8x1xf32> to vector<8x8xf32>
    %164 = arith.subf %160, %163 : vector<8x8xf32>
    %165 = math.exp %164 : vector<8x8xf32>
    %cst_76 = arith.constant dense<0.000000e+00> : vector<8xf32>
    %166 = vector.multi_reduction <add>, %165, %cst_76 [1] : vector<8x8xf32> to vector<8xf32>
    %167 = vector.shape_cast %166 : vector<8xf32> to vector<8x1xf32>
    %168 = tpu.reciprocal %167 {approx = true} : vector<8x1xf32> -> vector<8x1xf32>
    %169 = vector.broadcast %168 : vector<8x1xf32> to vector<8x8xf32>
    %170 = arith.mulf %165, %169 : vector<8x8xf32>
    %171 = arith.truncf %170 : vector<8x8xf32> to vector<8x8xbf16>
    %cst_77 = arith.constant dense<0.000000e+00> : vector<8x16xf32>
    %172 = tpu.matmul %171, %159, %cst_77 {dimension_numbers = #tpu.dot_dimension_numbers<[1], [0], [0], [1], [0, 0, 1, 1], [], []>} : vector<8x8xbf16>, vector<8x16xbf16>, vector<8x16xf32> -> vector<8x16xf32>
    %173 = arith.truncf %172 : vector<8x16xf32> to vector<8x16xbf16>
    %c0_78 = arith.constant 0 : index
    %c0_79 = arith.constant 0 : index
    %174 = vector.load %arg9[%c0_78, %c0_79] : memref<16x16xbf16, #tpu.memory_space<vmem>>, vector<16x16xbf16>
    %cst_80 = arith.constant dense<0.000000e+00> : vector<8x16xf32>
    %175 = tpu.matmul %173, %174, %cst_80 {dimension_numbers = #tpu.dot_dimension_numbers<[1], [0], [0], [1], [0, 0, 1, 1], [], []>} : vector<8x16xbf16>, vector<16x16xbf16>, vector<8x16xf32> -> vector<8x16xf32>
    %c0_81 = arith.constant 0 : index
    %c0_82 = arith.constant 0 : index
    %176 = vector.load %arg10[%c0_81, %c0_82] : memref<1x16xf32, #tpu.memory_space<vmem>>, vector<1x16xf32>
    %177 = vector.shape_cast %176 : vector<1x16xf32> to vector<16xf32>
    %178 = vector.shape_cast %177 : vector<16xf32> to vector<1x16xf32>
    %179 = vector.broadcast %178 : vector<1x16xf32> to vector<8x16xf32>
    %180 = arith.addf %175, %179 : vector<8x16xf32>
    %181 = arith.addf %132, %180 : vector<8x16xf32>
    %c0_83 = arith.constant 0 : index
    %c0_84 = arith.constant 0 : index
    %182 = vector.load %arg11[%c0_83, %c0_84] : memref<1x16xf32, #tpu.memory_space<vmem>>, vector<1x16xf32>
    %183 = vector.shape_cast %182 : vector<1x16xf32> to vector<16xf32>
    %c0_85 = arith.constant 0 : index
    %c0_86 = arith.constant 0 : index
    %184 = vector.load %arg12[%c0_85, %c0_86] : memref<1x16xf32, #tpu.memory_space<vmem>>, vector<1x16xf32>
    %185 = vector.shape_cast %184 : vector<1x16xf32> to vector<16xf32>
    %cst_87 = arith.constant dense<0.000000e+00> : vector<8xf32>
    %186 = vector.multi_reduction <add>, %181, %cst_87 [1] : vector<8x16xf32> to vector<8xf32>
    %187 = vector.shape_cast %186 : vector<8xf32> to vector<8x1xf32>
    %cst_88 = arith.constant 1.600000e+01 : f32
    %188 = vector.broadcast %cst_88 : f32 to vector<8x1xf32>
    %189 = arith.divf %187, %188 : vector<8x1xf32>
    %190 = vector.broadcast %189 : vector<8x1xf32> to vector<8x16xf32>
    %191 = arith.subf %181, %190 : vector<8x16xf32>
    %192 = arith.mulf %191, %191 : vector<8x16xf32>
    %cst_89 = arith.constant dense<0.000000e+00> : vector<8xf32>
    %193 = vector.multi_reduction <add>, %192, %cst_89 [1] : vector<8x16xf32> to vector<8xf32>
    %194 = vector.shape_cast %193 : vector<8xf32> to vector<8x1xf32>
    %cst_90 = arith.constant 1.600000e+01 : f32
    %195 = vector.broadcast %cst_90 : f32 to vector<8x1xf32>
    %196 = arith.divf %194, %195 : vector<8x1xf32>
    %197 = vector.broadcast %189 : vector<8x1xf32> to vector<8x16xf32>
    %198 = arith.subf %181, %197 : vector<8x16xf32>
    %cst_91 = arith.constant 9.99999974E-6 : f32
    %199 = vector.broadcast %cst_91 : f32 to vector<8x1xf32>
    %200 = arith.addf %196, %199 : vector<8x1xf32>
    %201 = math.rsqrt %200 : vector<8x1xf32>
    %202 = vector.broadcast %201 : vector<8x1xf32> to vector<8x16xf32>
    %203 = arith.mulf %198, %202 : vector<8x16xf32>
    %204 = vector.shape_cast %183 : vector<16xf32> to vector<1x16xf32>
    %205 = vector.broadcast %204 : vector<1x16xf32> to vector<8x16xf32>
    %206 = arith.mulf %203, %205 : vector<8x16xf32>
    %207 = vector.shape_cast %185 : vector<16xf32> to vector<1x16xf32>
    %208 = vector.broadcast %207 : vector<1x16xf32> to vector<8x16xf32>
    %209 = arith.addf %206, %208 : vector<8x16xf32>
    %210 = arith.truncf %209 : vector<8x16xf32> to vector<8x16xbf16>
    %c0_92 = arith.constant 0 : index
    %c0_93 = arith.constant 0 : index
    %211 = vector.load %arg13[%c0_92, %c0_93] : memref<16x32xbf16, #tpu.memory_space<vmem>>, vector<16x32xbf16>
    %cst_94 = arith.constant dense<0.000000e+00> : vector<8x32xf32>
    %212 = tpu.matmul %210, %211, %cst_94 {dimension_numbers = #tpu.dot_dimension_numbers<[1], [0], [0], [1], [0, 0, 1, 1], [], []>} : vector<8x16xbf16>, vector<16x32xbf16>, vector<8x32xf32> -> vector<8x32xf32>
    %c0_95 = arith.constant 0 : index
    %c0_96 = arith.constant 0 : index
    %213 = vector.load %arg14[%c0_95, %c0_96] : memref<1x32xf32, #tpu.memory_space<vmem>>, vector<1x32xf32>
    %214 = vector.shape_cast %213 : vector<1x32xf32> to vector<32xf32>
    %215 = vector.shape_cast %214 : vector<32xf32> to vector<1x32xf32>
    %216 = vector.broadcast %215 : vector<1x32xf32> to vector<8x32xf32>
    %217 = arith.addf %212, %216 : vector<8x32xf32>
    %cst_97 = arith.constant 0.000000e+00 : f32
    %218 = vector.broadcast %cst_97 : f32 to vector<8x32xf32>
    %219 = arith.maximumf %217, %218 : vector<8x32xf32>
    %220 = arith.truncf %219 : vector<8x32xf32> to vector<8x32xbf16>
    %c0_98 = arith.constant 0 : index
    %c0_99 = arith.constant 0 : index
    %221 = vector.load %arg15[%c0_98, %c0_99] : memref<32x16xbf16, #tpu.memory_space<vmem>>, vector<32x16xbf16>
    %cst_100 = arith.constant dense<0.000000e+00> : vector<8x16xf32>
    %222 = tpu.matmul %220, %221, %cst_100 {dimension_numbers = #tpu.dot_dimension_numbers<[1], [0], [0], [1], [0, 0, 1, 1], [], []>} : vector<8x32xbf16>, vector<32x16xbf16>, vector<8x16xf32> -> vector<8x16xf32>
    %c0_101 = arith.constant 0 : index
    %c0_102 = arith.constant 0 : index
    %223 = vector.load %arg16[%c0_101, %c0_102] : memref<1x16xf32, #tpu.memory_space<vmem>>, vector<1x16xf32>
    %224 = vector.shape_cast %223 : vector<1x16xf32> to vector<16xf32>
    %225 = vector.shape_cast %224 : vector<16xf32> to vector<1x16xf32>
    %226 = vector.broadcast %225 : vector<1x16xf32> to vector<8x16xf32>
    %227 = arith.addf %222, %226 : vector<8x16xf32>
    %228 = arith.addf %209, %227 : vector<8x16xf32>
    %c0_103 = arith.constant 0 : index
    %c0_104 = arith.constant 0 : index
    %229 = vector.load %arg17[%c0_103, %c0_104] : memref<1x16xf32, #tpu.memory_space<vmem>>, vector<1x16xf32>
    %230 = vector.shape_cast %229 : vector<1x16xf32> to vector<16xf32>
    %c0_105 = arith.constant 0 : index
    %c0_106 = arith.constant 0 : index
    %231 = vector.load %arg18[%c0_105, %c0_106] : memref<1x16xf32, #tpu.memory_space<vmem>>, vector<1x16xf32>
    %232 = vector.shape_cast %231 : vector<1x16xf32> to vector<16xf32>
    %cst_107 = arith.constant dense<0.000000e+00> : vector<8xf32>
    %233 = vector.multi_reduction <add>, %228, %cst_107 [1] : vector<8x16xf32> to vector<8xf32>
    %234 = vector.shape_cast %233 : vector<8xf32> to vector<8x1xf32>
    %cst_108 = arith.constant 1.600000e+01 : f32
    %235 = vector.broadcast %cst_108 : f32 to vector<8x1xf32>
    %236 = arith.divf %234, %235 : vector<8x1xf32>
    %237 = vector.broadcast %236 : vector<8x1xf32> to vector<8x16xf32>
    %238 = arith.subf %228, %237 : vector<8x16xf32>
    %239 = arith.mulf %238, %238 : vector<8x16xf32>
    %cst_109 = arith.constant dense<0.000000e+00> : vector<8xf32>
    %240 = vector.multi_reduction <add>, %239, %cst_109 [1] : vector<8x16xf32> to vector<8xf32>
    %241 = vector.shape_cast %240 : vector<8xf32> to vector<8x1xf32>
    %cst_110 = arith.constant 1.600000e+01 : f32
    %242 = vector.broadcast %cst_110 : f32 to vector<8x1xf32>
    %243 = arith.divf %241, %242 : vector<8x1xf32>
    %244 = vector.broadcast %236 : vector<8x1xf32> to vector<8x16xf32>
    %245 = arith.subf %228, %244 : vector<8x16xf32>
    %cst_111 = arith.constant 9.99999974E-6 : f32
    %246 = vector.broadcast %cst_111 : f32 to vector<8x1xf32>
    %247 = arith.addf %243, %246 : vector<8x1xf32>
    %248 = math.rsqrt %247 : vector<8x1xf32>
    %249 = vector.broadcast %248 : vector<8x1xf32> to vector<8x16xf32>
    %250 = arith.mulf %245, %249 : vector<8x16xf32>
    %251 = vector.shape_cast %230 : vector<16xf32> to vector<1x16xf32>
    %252 = vector.broadcast %251 : vector<1x16xf32> to vector<8x16xf32>
    %253 = arith.mulf %250, %252 : vector<8x16xf32>
    %254 = vector.shape_cast %232 : vector<16xf32> to vector<1x16xf32>
    %255 = vector.broadcast %254 : vector<1x16xf32> to vector<8x16xf32>
    %256 = arith.addf %253, %255 : vector<8x16xf32>
    %257 = arith.truncf %256 : vector<8x16xf32> to vector<8x16xbf16>
    %c16 = arith.constant 16 : index
    %c0_112 = arith.constant 0 : index
    %258 = vector.load %arg19[%c16, %c0_112] : memref<64x64xbf16, #tpu.memory_space<vmem>>, vector<16x64xbf16>
    %cst_113 = arith.constant dense<0.000000e+00> : vector<8x64xf32>
    %259 = tpu.matmul %257, %258, %cst_113 {dimension_numbers = #tpu.dot_dimension_numbers<[1], [0], [0], [1], [0, 0, 1, 1], [], []>} : vector<8x16xbf16>, vector<16x64xbf16>, vector<8x64xf32> -> vector<8x64xf32>
    %260 = arith.addf %131, %259 : vector<8x64xf32>
    %261 = vector.extract_strided_slice %0 {offsets = [0, 32], sizes = [8, 16], strides = [1, 1]} : vector<8x64xf32> to vector<8x16xf32>
    %262 = vector.extract_strided_slice %1 {offsets = [0, 32], sizes = [8, 16], strides = [1, 1]} : vector<8x64xf32> to vector<8x16xf32>
    %263 = arith.truncf %261 : vector<8x16xf32> to vector<8x16xbf16>
    %264 = arith.truncf %262 : vector<8x16xf32> to vector<8x16xbf16>
    %c0_114 = arith.constant 0 : index
    %c0_115 = arith.constant 0 : index
    %265 = vector.load %arg3[%c0_114, %c0_115] : memref<16x16xbf16, #tpu.memory_space<vmem>>, vector<16x16xbf16>
    %cst_116 = arith.constant dense<0.000000e+00> : vector<8x16xf32>
    %266 = tpu.matmul %263, %265, %cst_116 {dimension_numbers = #tpu.dot_dimension_numbers<[1], [0], [0], [1], [0, 0, 1, 1], [], []>} : vector<8x16xbf16>, vector<16x16xbf16>, vector<8x16xf32> -> vector<8x16xf32>
    %c0_117 = arith.constant 0 : index
    %c0_118 = arith.constant 0 : index
    %267 = vector.load %arg6[%c0_117, %c0_118] : memref<1x16xf32, #tpu.memory_space<vmem>>, vector<1x16xf32>
    %268 = vector.shape_cast %267 : vector<1x16xf32> to vector<16xf32>
    %269 = vector.shape_cast %268 : vector<16xf32> to vector<1x16xf32>
    %270 = vector.broadcast %269 : vector<1x16xf32> to vector<8x16xf32>
    %271 = arith.addf %266, %270 : vector<8x16xf32>
    %272 = arith.truncf %271 : vector<8x16xf32> to vector<8x16xbf16>
    %c0_119 = arith.constant 0 : index
    %c0_120 = arith.constant 0 : index
    %273 = vector.load %arg4[%c0_119, %c0_120] : memref<16x16xbf16, #tpu.memory_space<vmem>>, vector<16x16xbf16>
    %cst_121 = arith.constant dense<0.000000e+00> : vector<8x16xf32>
    %274 = tpu.matmul %264, %273, %cst_121 {dimension_numbers = #tpu.dot_dimension_numbers<[1], [0], [0], [1], [0, 0, 1, 1], [], []>} : vector<8x16xbf16>, vector<16x16xbf16>, vector<8x16xf32> -> vector<8x16xf32>
    %c0_122 = arith.constant 0 : index
    %c0_123 = arith.constant 0 : index
    %275 = vector.load %arg7[%c0_122, %c0_123] : memref<1x16xf32, #tpu.memory_space<vmem>>, vector<1x16xf32>
    %276 = vector.shape_cast %275 : vector<1x16xf32> to vector<16xf32>
    %277 = vector.shape_cast %276 : vector<16xf32> to vector<1x16xf32>
    %278 = vector.broadcast %277 : vector<1x16xf32> to vector<8x16xf32>
    %279 = arith.addf %274, %278 : vector<8x16xf32>
    %280 = arith.truncf %279 : vector<8x16xf32> to vector<8x16xbf16>
    %c0_124 = arith.constant 0 : index
    %c0_125 = arith.constant 0 : index
    %281 = vector.load %arg5[%c0_124, %c0_125] : memref<16x16xbf16, #tpu.memory_space<vmem>>, vector<16x16xbf16>
    %cst_126 = arith.constant dense<0.000000e+00> : vector<8x16xf32>
    %282 = tpu.matmul %264, %281, %cst_126 {dimension_numbers = #tpu.dot_dimension_numbers<[1], [0], [0], [1], [0, 0, 1, 1], [], []>} : vector<8x16xbf16>, vector<16x16xbf16>, vector<8x16xf32> -> vector<8x16xf32>
    %c0_127 = arith.constant 0 : index
    %c0_128 = arith.constant 0 : index
    %283 = vector.load %arg8[%c0_127, %c0_128] : memref<1x16xf32, #tpu.memory_space<vmem>>, vector<1x16xf32>
    %284 = vector.shape_cast %283 : vector<1x16xf32> to vector<16xf32>
    %285 = vector.shape_cast %284 : vector<16xf32> to vector<1x16xf32>
    %286 = vector.broadcast %285 : vector<1x16xf32> to vector<8x16xf32>
    %287 = arith.addf %282, %286 : vector<8x16xf32>
    %288 = arith.truncf %287 : vector<8x16xf32> to vector<8x16xbf16>
    %cst_129 = arith.constant dense<0.000000e+00> : vector<8x8xf32>
    %289 = tpu.matmul %272, %280, %cst_129 {dimension_numbers = #tpu.dot_dimension_numbers<[1], [1], [0], [0], [0, 0, 1, 0], [], []>} : vector<8x16xbf16>, vector<8x16xbf16>, vector<8x8xf32> -> vector<8x8xf32>
    %cst_130 = arith.constant dense<0xFF800000> : vector<8xf32>
    %290 = vector.multi_reduction <maximumf>, %289, %cst_130 [1] : vector<8x8xf32> to vector<8xf32>
    %291 = vector.shape_cast %290 : vector<8xf32> to vector<8x1xf32>
    %292 = vector.broadcast %291 : vector<8x1xf32> to vector<8x8xf32>
    %293 = arith.subf %289, %292 : vector<8x8xf32>
    %294 = math.exp %293 : vector<8x8xf32>
    %cst_131 = arith.constant dense<0.000000e+00> : vector<8xf32>
    %295 = vector.multi_reduction <add>, %294, %cst_131 [1] : vector<8x8xf32> to vector<8xf32>
    %296 = vector.shape_cast %295 : vector<8xf32> to vector<8x1xf32>
    %297 = tpu.reciprocal %296 {approx = true} : vector<8x1xf32> -> vector<8x1xf32>
    %298 = vector.broadcast %297 : vector<8x1xf32> to vector<8x8xf32>
    %299 = arith.mulf %294, %298 : vector<8x8xf32>
    %300 = arith.truncf %299 : vector<8x8xf32> to vector<8x8xbf16>
    %cst_132 = arith.constant dense<0.000000e+00> : vector<8x16xf32>
    %301 = tpu.matmul %300, %288, %cst_132 {dimension_numbers = #tpu.dot_dimension_numbers<[1], [0], [0], [1], [0, 0, 1, 1], [], []>} : vector<8x8xbf16>, vector<8x16xbf16>, vector<8x16xf32> -> vector<8x16xf32>
    %302 = arith.truncf %301 : vector<8x16xf32> to vector<8x16xbf16>
    %c0_133 = arith.constant 0 : index
    %c0_134 = arith.constant 0 : index
    %303 = vector.load %arg9[%c0_133, %c0_134] : memref<16x16xbf16, #tpu.memory_space<vmem>>, vector<16x16xbf16>
    %cst_135 = arith.constant dense<0.000000e+00> : vector<8x16xf32>
    %304 = tpu.matmul %302, %303, %cst_135 {dimension_numbers = #tpu.dot_dimension_numbers<[1], [0], [0], [1], [0, 0, 1, 1], [], []>} : vector<8x16xbf16>, vector<16x16xbf16>, vector<8x16xf32> -> vector<8x16xf32>
    %c0_136 = arith.constant 0 : index
    %c0_137 = arith.constant 0 : index
    %305 = vector.load %arg10[%c0_136, %c0_137] : memref<1x16xf32, #tpu.memory_space<vmem>>, vector<1x16xf32>
    %306 = vector.shape_cast %305 : vector<1x16xf32> to vector<16xf32>
    %307 = vector.shape_cast %306 : vector<16xf32> to vector<1x16xf32>
    %308 = vector.broadcast %307 : vector<1x16xf32> to vector<8x16xf32>
    %309 = arith.addf %304, %308 : vector<8x16xf32>
    %310 = arith.addf %261, %309 : vector<8x16xf32>
    %c0_138 = arith.constant 0 : index
    %c0_139 = arith.constant 0 : index
    %311 = vector.load %arg11[%c0_138, %c0_139] : memref<1x16xf32, #tpu.memory_space<vmem>>, vector<1x16xf32>
    %312 = vector.shape_cast %311 : vector<1x16xf32> to vector<16xf32>
    %c0_140 = arith.constant 0 : index
    %c0_141 = arith.constant 0 : index
    %313 = vector.load %arg12[%c0_140, %c0_141] : memref<1x16xf32, #tpu.memory_space<vmem>>, vector<1x16xf32>
    %314 = vector.shape_cast %313 : vector<1x16xf32> to vector<16xf32>
    %cst_142 = arith.constant dense<0.000000e+00> : vector<8xf32>
    %315 = vector.multi_reduction <add>, %310, %cst_142 [1] : vector<8x16xf32> to vector<8xf32>
    %316 = vector.shape_cast %315 : vector<8xf32> to vector<8x1xf32>
    %cst_143 = arith.constant 1.600000e+01 : f32
    %317 = vector.broadcast %cst_143 : f32 to vector<8x1xf32>
    %318 = arith.divf %316, %317 : vector<8x1xf32>
    %319 = vector.broadcast %318 : vector<8x1xf32> to vector<8x16xf32>
    %320 = arith.subf %310, %319 : vector<8x16xf32>
    %321 = arith.mulf %320, %320 : vector<8x16xf32>
    %cst_144 = arith.constant dense<0.000000e+00> : vector<8xf32>
    %322 = vector.multi_reduction <add>, %321, %cst_144 [1] : vector<8x16xf32> to vector<8xf32>
    %323 = vector.shape_cast %322 : vector<8xf32> to vector<8x1xf32>
    %cst_145 = arith.constant 1.600000e+01 : f32
    %324 = vector.broadcast %cst_145 : f32 to vector<8x1xf32>
    %325 = arith.divf %323, %324 : vector<8x1xf32>
    %326 = vector.broadcast %318 : vector<8x1xf32> to vector<8x16xf32>
    %327 = arith.subf %310, %326 : vector<8x16xf32>
    %cst_146 = arith.constant 9.99999974E-6 : f32
    %328 = vector.broadcast %cst_146 : f32 to vector<8x1xf32>
    %329 = arith.addf %325, %328 : vector<8x1xf32>
    %330 = math.rsqrt %329 : vector<8x1xf32>
    %331 = vector.broadcast %330 : vector<8x1xf32> to vector<8x16xf32>
    %332 = arith.mulf %327, %331 : vector<8x16xf32>
    %333 = vector.shape_cast %312 : vector<16xf32> to vector<1x16xf32>
    %334 = vector.broadcast %333 : vector<1x16xf32> to vector<8x16xf32>
    %335 = arith.mulf %332, %334 : vector<8x16xf32>
    %336 = vector.shape_cast %314 : vector<16xf32> to vector<1x16xf32>
    %337 = vector.broadcast %336 : vector<1x16xf32> to vector<8x16xf32>
    %338 = arith.addf %335, %337 : vector<8x16xf32>
    %339 = arith.truncf %338 : vector<8x16xf32> to vector<8x16xbf16>
    %c0_147 = arith.constant 0 : index
    %c0_148 = arith.constant 0 : index
    %340 = vector.load %arg13[%c0_147, %c0_148] : memref<16x32xbf16, #tpu.memory_space<vmem>>, vector<16x32xbf16>
    %cst_149 = arith.constant dense<0.000000e+00> : vector<8x32xf32>
    %341 = tpu.matmul %339, %340, %cst_149 {dimension_numbers = #tpu.dot_dimension_numbers<[1], [0], [0], [1], [0, 0, 1, 1], [], []>} : vector<8x16xbf16>, vector<16x32xbf16>, vector<8x32xf32> -> vector<8x32xf32>
    %c0_150 = arith.constant 0 : index
    %c0_151 = arith.constant 0 : index
    %342 = vector.load %arg14[%c0_150, %c0_151] : memref<1x32xf32, #tpu.memory_space<vmem>>, vector<1x32xf32>
    %343 = vector.shape_cast %342 : vector<1x32xf32> to vector<32xf32>
    %344 = vector.shape_cast %343 : vector<32xf32> to vector<1x32xf32>
    %345 = vector.broadcast %344 : vector<1x32xf32> to vector<8x32xf32>
    %346 = arith.addf %341, %345 : vector<8x32xf32>
    %cst_152 = arith.constant 0.000000e+00 : f32
    %347 = vector.broadcast %cst_152 : f32 to vector<8x32xf32>
    %348 = arith.maximumf %346, %347 : vector<8x32xf32>
    %349 = arith.truncf %348 : vector<8x32xf32> to vector<8x32xbf16>
    %c0_153 = arith.constant 0 : index
    %c0_154 = arith.constant 0 : index
    %350 = vector.load %arg15[%c0_153, %c0_154] : memref<32x16xbf16, #tpu.memory_space<vmem>>, vector<32x16xbf16>
    %cst_155 = arith.constant dense<0.000000e+00> : vector<8x16xf32>
    %351 = tpu.matmul %349, %350, %cst_155 {dimension_numbers = #tpu.dot_dimension_numbers<[1], [0], [0], [1], [0, 0, 1, 1], [], []>} : vector<8x32xbf16>, vector<32x16xbf16>, vector<8x16xf32> -> vector<8x16xf32>
    %c0_156 = arith.constant 0 : index
    %c0_157 = arith.constant 0 : index
    %352 = vector.load %arg16[%c0_156, %c0_157] : memref<1x16xf32, #tpu.memory_space<vmem>>, vector<1x16xf32>
    %353 = vector.shape_cast %352 : vector<1x16xf32> to vector<16xf32>
    %354 = vector.shape_cast %353 : vector<16xf32> to vector<1x16xf32>
    %355 = vector.broadcast %354 : vector<1x16xf32> to vector<8x16xf32>
    %356 = arith.addf %351, %355 : vector<8x16xf32>
    %357 = arith.addf %338, %356 : vector<8x16xf32>
    %c0_158 = arith.constant 0 : index
    %c0_159 = arith.constant 0 : index
    %358 = vector.load %arg17[%c0_158, %c0_159] : memref<1x16xf32, #tpu.memory_space<vmem>>, vector<1x16xf32>
    %359 = vector.shape_cast %358 : vector<1x16xf32> to vector<16xf32>
    %c0_160 = arith.constant 0 : index
    %c0_161 = arith.constant 0 : index
    %360 = vector.load %arg18[%c0_160, %c0_161] : memref<1x16xf32, #tpu.memory_space<vmem>>, vector<1x16xf32>
    %361 = vector.shape_cast %360 : vector<1x16xf32> to vector<16xf32>
    %cst_162 = arith.constant dense<0.000000e+00> : vector<8xf32>
    %362 = vector.multi_reduction <add>, %357, %cst_162 [1] : vector<8x16xf32> to vector<8xf32>
    %363 = vector.shape_cast %362 : vector<8xf32> to vector<8x1xf32>
    %cst_163 = arith.constant 1.600000e+01 : f32
    %364 = vector.broadcast %cst_163 : f32 to vector<8x1xf32>
    %365 = arith.divf %363, %364 : vector<8x1xf32>
    %366 = vector.broadcast %365 : vector<8x1xf32> to vector<8x16xf32>
    %367 = arith.subf %357, %366 : vector<8x16xf32>
    %368 = arith.mulf %367, %367 : vector<8x16xf32>
    %cst_164 = arith.constant dense<0.000000e+00> : vector<8xf32>
    %369 = vector.multi_reduction <add>, %368, %cst_164 [1] : vector<8x16xf32> to vector<8xf32>
    %370 = vector.shape_cast %369 : vector<8xf32> to vector<8x1xf32>
    %cst_165 = arith.constant 1.600000e+01 : f32
    %371 = vector.broadcast %cst_165 : f32 to vector<8x1xf32>
    %372 = arith.divf %370, %371 : vector<8x1xf32>
    %373 = vector.broadcast %365 : vector<8x1xf32> to vector<8x16xf32>
    %374 = arith.subf %357, %373 : vector<8x16xf32>
    %cst_166 = arith.constant 9.99999974E-6 : f32
    %375 = vector.broadcast %cst_166 : f32 to vector<8x1xf32>
    %376 = arith.addf %372, %375 : vector<8x1xf32>
    %377 = math.rsqrt %376 : vector<8x1xf32>
    %378 = vector.broadcast %377 : vector<8x1xf32> to vector<8x16xf32>
    %379 = arith.mulf %374, %378 : vector<8x16xf32>
    %380 = vector.shape_cast %359 : vector<16xf32> to vector<1x16xf32>
    %381 = vector.broadcast %380 : vector<1x16xf32> to vector<8x16xf32>
    %382 = arith.mulf %379, %381 : vector<8x16xf32>
    %383 = vector.shape_cast %361 : vector<16xf32> to vector<1x16xf32>
    %384 = vector.broadcast %383 : vector<1x16xf32> to vector<8x16xf32>
    %385 = arith.addf %382, %384 : vector<8x16xf32>
    %386 = arith.truncf %385 : vector<8x16xf32> to vector<8x16xbf16>
    %c32 = arith.constant 32 : index
    %c0_167 = arith.constant 0 : index
    %387 = vector.load %arg19[%c32, %c0_167] : memref<64x64xbf16, #tpu.memory_space<vmem>>, vector<16x64xbf16>
    %cst_168 = arith.constant dense<0.000000e+00> : vector<8x64xf32>
    %388 = tpu.matmul %386, %387, %cst_168 {dimension_numbers = #tpu.dot_dimension_numbers<[1], [0], [0], [1], [0, 0, 1, 1], [], []>} : vector<8x16xbf16>, vector<16x64xbf16>, vector<8x64xf32> -> vector<8x64xf32>
    %389 = arith.addf %260, %388 : vector<8x64xf32>
    %390 = vector.extract_strided_slice %0 {offsets = [0, 48], sizes = [8, 16], strides = [1, 1]} : vector<8x64xf32> to vector<8x16xf32>
    %391 = vector.extract_strided_slice %1 {offsets = [0, 48], sizes = [8, 16], strides = [1, 1]} : vector<8x64xf32> to vector<8x16xf32>
    %392 = arith.truncf %390 : vector<8x16xf32> to vector<8x16xbf16>
    %393 = arith.truncf %391 : vector<8x16xf32> to vector<8x16xbf16>
    %c0_169 = arith.constant 0 : index
    %c0_170 = arith.constant 0 : index
    %394 = vector.load %arg3[%c0_169, %c0_170] : memref<16x16xbf16, #tpu.memory_space<vmem>>, vector<16x16xbf16>
    %cst_171 = arith.constant dense<0.000000e+00> : vector<8x16xf32>
    %395 = tpu.matmul %392, %394, %cst_171 {dimension_numbers = #tpu.dot_dimension_numbers<[1], [0], [0], [1], [0, 0, 1, 1], [], []>} : vector<8x16xbf16>, vector<16x16xbf16>, vector<8x16xf32> -> vector<8x16xf32>
    %c0_172 = arith.constant 0 : index
    %c0_173 = arith.constant 0 : index
    %396 = vector.load %arg6[%c0_172, %c0_173] : memref<1x16xf32, #tpu.memory_space<vmem>>, vector<1x16xf32>
    %397 = vector.shape_cast %396 : vector<1x16xf32> to vector<16xf32>
    %398 = vector.shape_cast %397 : vector<16xf32> to vector<1x16xf32>
    %399 = vector.broadcast %398 : vector<1x16xf32> to vector<8x16xf32>
    %400 = arith.addf %395, %399 : vector<8x16xf32>
    %401 = arith.truncf %400 : vector<8x16xf32> to vector<8x16xbf16>
    %c0_174 = arith.constant 0 : index
    %c0_175 = arith.constant 0 : index
    %402 = vector.load %arg4[%c0_174, %c0_175] : memref<16x16xbf16, #tpu.memory_space<vmem>>, vector<16x16xbf16>
    %cst_176 = arith.constant dense<0.000000e+00> : vector<8x16xf32>
    %403 = tpu.matmul %393, %402, %cst_176 {dimension_numbers = #tpu.dot_dimension_numbers<[1], [0], [0], [1], [0, 0, 1, 1], [], []>} : vector<8x16xbf16>, vector<16x16xbf16>, vector<8x16xf32> -> vector<8x16xf32>
    %c0_177 = arith.constant 0 : index
    %c0_178 = arith.constant 0 : index
    %404 = vector.load %arg7[%c0_177, %c0_178] : memref<1x16xf32, #tpu.memory_space<vmem>>, vector<1x16xf32>
    %405 = vector.shape_cast %404 : vector<1x16xf32> to vector<16xf32>
    %406 = vector.shape_cast %405 : vector<16xf32> to vector<1x16xf32>
    %407 = vector.broadcast %406 : vector<1x16xf32> to vector<8x16xf32>
    %408 = arith.addf %403, %407 : vector<8x16xf32>
    %409 = arith.truncf %408 : vector<8x16xf32> to vector<8x16xbf16>
    %c0_179 = arith.constant 0 : index
    %c0_180 = arith.constant 0 : index
    %410 = vector.load %arg5[%c0_179, %c0_180] : memref<16x16xbf16, #tpu.memory_space<vmem>>, vector<16x16xbf16>
    %cst_181 = arith.constant dense<0.000000e+00> : vector<8x16xf32>
    %411 = tpu.matmul %393, %410, %cst_181 {dimension_numbers = #tpu.dot_dimension_numbers<[1], [0], [0], [1], [0, 0, 1, 1], [], []>} : vector<8x16xbf16>, vector<16x16xbf16>, vector<8x16xf32> -> vector<8x16xf32>
    %c0_182 = arith.constant 0 : index
    %c0_183 = arith.constant 0 : index
    %412 = vector.load %arg8[%c0_182, %c0_183] : memref<1x16xf32, #tpu.memory_space<vmem>>, vector<1x16xf32>
    %413 = vector.shape_cast %412 : vector<1x16xf32> to vector<16xf32>
    %414 = vector.shape_cast %413 : vector<16xf32> to vector<1x16xf32>
    %415 = vector.broadcast %414 : vector<1x16xf32> to vector<8x16xf32>
    %416 = arith.addf %411, %415 : vector<8x16xf32>
    %417 = arith.truncf %416 : vector<8x16xf32> to vector<8x16xbf16>
    %cst_184 = arith.constant dense<0.000000e+00> : vector<8x8xf32>
    %418 = tpu.matmul %401, %409, %cst_184 {dimension_numbers = #tpu.dot_dimension_numbers<[1], [1], [0], [0], [0, 0, 1, 0], [], []>} : vector<8x16xbf16>, vector<8x16xbf16>, vector<8x8xf32> -> vector<8x8xf32>
    %cst_185 = arith.constant dense<0xFF800000> : vector<8xf32>
    %419 = vector.multi_reduction <maximumf>, %418, %cst_185 [1] : vector<8x8xf32> to vector<8xf32>
    %420 = vector.shape_cast %419 : vector<8xf32> to vector<8x1xf32>
    %421 = vector.broadcast %420 : vector<8x1xf32> to vector<8x8xf32>
    %422 = arith.subf %418, %421 : vector<8x8xf32>
    %423 = math.exp %422 : vector<8x8xf32>
    %cst_186 = arith.constant dense<0.000000e+00> : vector<8xf32>
    %424 = vector.multi_reduction <add>, %423, %cst_186 [1] : vector<8x8xf32> to vector<8xf32>
    %425 = vector.shape_cast %424 : vector<8xf32> to vector<8x1xf32>
    %426 = tpu.reciprocal %425 {approx = true} : vector<8x1xf32> -> vector<8x1xf32>
    %427 = vector.broadcast %426 : vector<8x1xf32> to vector<8x8xf32>
    %428 = arith.mulf %423, %427 : vector<8x8xf32>
    %429 = arith.truncf %428 : vector<8x8xf32> to vector<8x8xbf16>
    %cst_187 = arith.constant dense<0.000000e+00> : vector<8x16xf32>
    %430 = tpu.matmul %429, %417, %cst_187 {dimension_numbers = #tpu.dot_dimension_numbers<[1], [0], [0], [1], [0, 0, 1, 1], [], []>} : vector<8x8xbf16>, vector<8x16xbf16>, vector<8x16xf32> -> vector<8x16xf32>
    %431 = arith.truncf %430 : vector<8x16xf32> to vector<8x16xbf16>
    %c0_188 = arith.constant 0 : index
    %c0_189 = arith.constant 0 : index
    %432 = vector.load %arg9[%c0_188, %c0_189] : memref<16x16xbf16, #tpu.memory_space<vmem>>, vector<16x16xbf16>
    %cst_190 = arith.constant dense<0.000000e+00> : vector<8x16xf32>
    %433 = tpu.matmul %431, %432, %cst_190 {dimension_numbers = #tpu.dot_dimension_numbers<[1], [0], [0], [1], [0, 0, 1, 1], [], []>} : vector<8x16xbf16>, vector<16x16xbf16>, vector<8x16xf32> -> vector<8x16xf32>
    %c0_191 = arith.constant 0 : index
    %c0_192 = arith.constant 0 : index
    %434 = vector.load %arg10[%c0_191, %c0_192] : memref<1x16xf32, #tpu.memory_space<vmem>>, vector<1x16xf32>
    %435 = vector.shape_cast %434 : vector<1x16xf32> to vector<16xf32>
    %436 = vector.shape_cast %435 : vector<16xf32> to vector<1x16xf32>
    %437 = vector.broadcast %436 : vector<1x16xf32> to vector<8x16xf32>
    %438 = arith.addf %433, %437 : vector<8x16xf32>
    %439 = arith.addf %390, %438 : vector<8x16xf32>
    %c0_193 = arith.constant 0 : index
    %c0_194 = arith.constant 0 : index
    %440 = vector.load %arg11[%c0_193, %c0_194] : memref<1x16xf32, #tpu.memory_space<vmem>>, vector<1x16xf32>
    %441 = vector.shape_cast %440 : vector<1x16xf32> to vector<16xf32>
    %c0_195 = arith.constant 0 : index
    %c0_196 = arith.constant 0 : index
    %442 = vector.load %arg12[%c0_195, %c0_196] : memref<1x16xf32, #tpu.memory_space<vmem>>, vector<1x16xf32>
    %443 = vector.shape_cast %442 : vector<1x16xf32> to vector<16xf32>
    %cst_197 = arith.constant dense<0.000000e+00> : vector<8xf32>
    %444 = vector.multi_reduction <add>, %439, %cst_197 [1] : vector<8x16xf32> to vector<8xf32>
    %445 = vector.shape_cast %444 : vector<8xf32> to vector<8x1xf32>
    %cst_198 = arith.constant 1.600000e+01 : f32
    %446 = vector.broadcast %cst_198 : f32 to vector<8x1xf32>
    %447 = arith.divf %445, %446 : vector<8x1xf32>
    %448 = vector.broadcast %447 : vector<8x1xf32> to vector<8x16xf32>
    %449 = arith.subf %439, %448 : vector<8x16xf32>
    %450 = arith.mulf %449, %449 : vector<8x16xf32>
    %cst_199 = arith.constant dense<0.000000e+00> : vector<8xf32>
    %451 = vector.multi_reduction <add>, %450, %cst_199 [1] : vector<8x16xf32> to vector<8xf32>
    %452 = vector.shape_cast %451 : vector<8xf32> to vector<8x1xf32>
    %cst_200 = arith.constant 1.600000e+01 : f32
    %453 = vector.broadcast %cst_200 : f32 to vector<8x1xf32>
    %454 = arith.divf %452, %453 : vector<8x1xf32>
    %455 = vector.broadcast %447 : vector<8x1xf32> to vector<8x16xf32>
    %456 = arith.subf %439, %455 : vector<8x16xf32>
    %cst_201 = arith.constant 9.99999974E-6 : f32
    %457 = vector.broadcast %cst_201 : f32 to vector<8x1xf32>
    %458 = arith.addf %454, %457 : vector<8x1xf32>
    %459 = math.rsqrt %458 : vector<8x1xf32>
    %460 = vector.broadcast %459 : vector<8x1xf32> to vector<8x16xf32>
    %461 = arith.mulf %456, %460 : vector<8x16xf32>
    %462 = vector.shape_cast %441 : vector<16xf32> to vector<1x16xf32>
    %463 = vector.broadcast %462 : vector<1x16xf32> to vector<8x16xf32>
    %464 = arith.mulf %461, %463 : vector<8x16xf32>
    %465 = vector.shape_cast %443 : vector<16xf32> to vector<1x16xf32>
    %466 = vector.broadcast %465 : vector<1x16xf32> to vector<8x16xf32>
    %467 = arith.addf %464, %466 : vector<8x16xf32>
    %468 = arith.truncf %467 : vector<8x16xf32> to vector<8x16xbf16>
    %c0_202 = arith.constant 0 : index
    %c0_203 = arith.constant 0 : index
    %469 = vector.load %arg13[%c0_202, %c0_203] : memref<16x32xbf16, #tpu.memory_space<vmem>>, vector<16x32xbf16>
    %cst_204 = arith.constant dense<0.000000e+00> : vector<8x32xf32>
    %470 = tpu.matmul %468, %469, %cst_204 {dimension_numbers = #tpu.dot_dimension_numbers<[1], [0], [0], [1], [0, 0, 1, 1], [], []>} : vector<8x16xbf16>, vector<16x32xbf16>, vector<8x32xf32> -> vector<8x32xf32>
    %c0_205 = arith.constant 0 : index
    %c0_206 = arith.constant 0 : index
    %471 = vector.load %arg14[%c0_205, %c0_206] : memref<1x32xf32, #tpu.memory_space<vmem>>, vector<1x32xf32>
    %472 = vector.shape_cast %471 : vector<1x32xf32> to vector<32xf32>
    %473 = vector.shape_cast %472 : vector<32xf32> to vector<1x32xf32>
    %474 = vector.broadcast %473 : vector<1x32xf32> to vector<8x32xf32>
    %475 = arith.addf %470, %474 : vector<8x32xf32>
    %cst_207 = arith.constant 0.000000e+00 : f32
    %476 = vector.broadcast %cst_207 : f32 to vector<8x32xf32>
    %477 = arith.maximumf %475, %476 : vector<8x32xf32>
    %478 = arith.truncf %477 : vector<8x32xf32> to vector<8x32xbf16>
    %c0_208 = arith.constant 0 : index
    %c0_209 = arith.constant 0 : index
    %479 = vector.load %arg15[%c0_208, %c0_209] : memref<32x16xbf16, #tpu.memory_space<vmem>>, vector<32x16xbf16>
    %cst_210 = arith.constant dense<0.000000e+00> : vector<8x16xf32>
    %480 = tpu.matmul %478, %479, %cst_210 {dimension_numbers = #tpu.dot_dimension_numbers<[1], [0], [0], [1], [0, 0, 1, 1], [], []>} : vector<8x32xbf16>, vector<32x16xbf16>, vector<8x16xf32> -> vector<8x16xf32>
    %c0_211 = arith.constant 0 : index
    %c0_212 = arith.constant 0 : index
    %481 = vector.load %arg16[%c0_211, %c0_212] : memref<1x16xf32, #tpu.memory_space<vmem>>, vector<1x16xf32>
    %482 = vector.shape_cast %481 : vector<1x16xf32> to vector<16xf32>
    %483 = vector.shape_cast %482 : vector<16xf32> to vector<1x16xf32>
    %484 = vector.broadcast %483 : vector<1x16xf32> to vector<8x16xf32>
    %485 = arith.addf %480, %484 : vector<8x16xf32>
    %486 = arith.addf %467, %485 : vector<8x16xf32>
    %c0_213 = arith.constant 0 : index
    %c0_214 = arith.constant 0 : index
    %487 = vector.load %arg17[%c0_213, %c0_214] : memref<1x16xf32, #tpu.memory_space<vmem>>, vector<1x16xf32>
    %488 = vector.shape_cast %487 : vector<1x16xf32> to vector<16xf32>
    %c0_215 = arith.constant 0 : index
    %c0_216 = arith.constant 0 : index
    %489 = vector.load %arg18[%c0_215, %c0_216] : memref<1x16xf32, #tpu.memory_space<vmem>>, vector<1x16xf32>
    %490 = vector.shape_cast %489 : vector<1x16xf32> to vector<16xf32>
    %cst_217 = arith.constant dense<0.000000e+00> : vector<8xf32>
    %491 = vector.multi_reduction <add>, %486, %cst_217 [1] : vector<8x16xf32> to vector<8xf32>
    %492 = vector.shape_cast %491 : vector<8xf32> to vector<8x1xf32>
    %cst_218 = arith.constant 1.600000e+01 : f32
    %493 = vector.broadcast %cst_218 : f32 to vector<8x1xf32>
    %494 = arith.divf %492, %493 : vector<8x1xf32>
    %495 = vector.broadcast %494 : vector<8x1xf32> to vector<8x16xf32>
    %496 = arith.subf %486, %495 : vector<8x16xf32>
    %497 = arith.mulf %496, %496 : vector<8x16xf32>
    %cst_219 = arith.constant dense<0.000000e+00> : vector<8xf32>
    %498 = vector.multi_reduction <add>, %497, %cst_219 [1] : vector<8x16xf32> to vector<8xf32>
    %499 = vector.shape_cast %498 : vector<8xf32> to vector<8x1xf32>
    %cst_220 = arith.constant 1.600000e+01 : f32
    %500 = vector.broadcast %cst_220 : f32 to vector<8x1xf32>
    %501 = arith.divf %499, %500 : vector<8x1xf32>
    %502 = vector.broadcast %494 : vector<8x1xf32> to vector<8x16xf32>
    %503 = arith.subf %486, %502 : vector<8x16xf32>
    %cst_221 = arith.constant 9.99999974E-6 : f32
    %504 = vector.broadcast %cst_221 : f32 to vector<8x1xf32>
    %505 = arith.addf %501, %504 : vector<8x1xf32>
    %506 = math.rsqrt %505 : vector<8x1xf32>
    %507 = vector.broadcast %506 : vector<8x1xf32> to vector<8x16xf32>
    %508 = arith.mulf %503, %507 : vector<8x16xf32>
    %509 = vector.shape_cast %488 : vector<16xf32> to vector<1x16xf32>
    %510 = vector.broadcast %509 : vector<1x16xf32> to vector<8x16xf32>
    %511 = arith.mulf %508, %510 : vector<8x16xf32>
    %512 = vector.shape_cast %490 : vector<16xf32> to vector<1x16xf32>
    %513 = vector.broadcast %512 : vector<1x16xf32> to vector<8x16xf32>
    %514 = arith.addf %511, %513 : vector<8x16xf32>
    %515 = arith.truncf %514 : vector<8x16xf32> to vector<8x16xbf16>
    %c48 = arith.constant 48 : index
    %c0_222 = arith.constant 0 : index
    %516 = vector.load %arg19[%c48, %c0_222] : memref<64x64xbf16, #tpu.memory_space<vmem>>, vector<16x64xbf16>
    %cst_223 = arith.constant dense<0.000000e+00> : vector<8x64xf32>
    %517 = tpu.matmul %515, %516, %cst_223 {dimension_numbers = #tpu.dot_dimension_numbers<[1], [0], [0], [1], [0, 0, 1, 1], [], []>} : vector<8x16xbf16>, vector<16x64xbf16>, vector<8x64xf32> -> vector<8x64xf32>
    %518 = arith.addf %389, %517 : vector<8x64xf32>
    %c0_224 = arith.constant 0 : index
    %c0_225 = arith.constant 0 : index
    %519 = vector.load %arg20[%c0_224, %c0_225] : memref<1x64xf32, #tpu.memory_space<vmem>>, vector<1x64xf32>
    %520 = vector.shape_cast %519 : vector<1x64xf32> to vector<64xf32>
    %521 = vector.shape_cast %520 : vector<64xf32> to vector<1x64xf32>
    %522 = vector.broadcast %521 : vector<1x64xf32> to vector<8x64xf32>
    %523 = arith.addf %518, %522 : vector<8x64xf32>
    %c0_226 = arith.constant 0 : index
    %c0_227 = arith.constant 0 : index
    %524 = vector.load %arg21[%c0_226, %c0_227] : memref<1x64xf32, #tpu.memory_space<vmem>>, vector<1x64xf32>
    %525 = vector.shape_cast %524 : vector<1x64xf32> to vector<64xf32>
    %526 = vector.shape_cast %525 : vector<64xf32> to vector<1x64xf32>
    %527 = vector.broadcast %526 : vector<1x64xf32> to vector<8x64xf32>
    %528 = arith.mulf %523, %527 : vector<8x64xf32>
    %c0_228 = arith.constant 0 : index
    %c0_229 = arith.constant 0 : index
    %529 = vector.load %arg22[%c0_228, %c0_229] : memref<1x64xf32, #tpu.memory_space<vmem>>, vector<1x64xf32>
    %530 = vector.shape_cast %529 : vector<1x64xf32> to vector<64xf32>
    %531 = vector.shape_cast %530 : vector<64xf32> to vector<1x64xf32>
    %532 = vector.broadcast %531 : vector<1x64xf32> to vector<8x64xf32>
    %533 = arith.addf %528, %532 : vector<8x64xf32>
    %cst_230 = arith.constant 0.000000e+00 : f32
    %534 = vector.broadcast %cst_230 : f32 to vector<8x64xf32>
    %535 = arith.maximumf %533, %534 : vector<8x64xf32>
    %c0_231 = arith.constant 0 : index
    %c0_232 = arith.constant 0 : index
    %536 = vector.load %arg23[%c0_231, %c0_232] : memref<1x64xf32, #tpu.memory_space<vmem>>, vector<1x64xf32>
    %537 = vector.shape_cast %536 : vector<1x64xf32> to vector<64xf32>
    %538 = vector.shape_cast %537 : vector<64xf32> to vector<1x64xf32>
    %539 = vector.broadcast %538 : vector<1x64xf32> to vector<8x64xf32>
    %540 = arith.mulf %535, %539 : vector<8x64xf32>
    %cst_233 = arith.constant dense<0.000000e+00> : vector<8xf32>
    %541 = vector.multi_reduction <add>, %540, %cst_233 [1] : vector<8x64xf32> to vector<8xf32>
    %542 = vector.shape_cast %541 : vector<8xf32> to vector<8x1xf32>
    %c0_234 = arith.constant 0 : index
    %c0_235 = arith.constant 0 : index
    %543 = vector.load %arg24[%c0_234, %c0_235] : memref<1x1xf32, #tpu.memory_space<vmem>>, vector<1x1xf32>
    %544 = vector.shape_cast %543 : vector<1x1xf32> to vector<1xf32>
    %545 = vector.shape_cast %544 : vector<1xf32> to vector<1x1xf32>
    %546 = vector.broadcast %545 : vector<1x1xf32> to vector<8x1xf32>
    %547 = arith.addf %542, %546 : vector<8x1xf32>
    %cst_236 = arith.constant 0.000000e+00 : f32
    %548 = vector.broadcast %cst_236 : f32 to vector<8x1xf32>
    %549 = arith.subf %548, %547 : vector<8x1xf32>
    %550 = math.exp %549 : vector<8x1xf32>
    %cst_237 = arith.constant 1.000000e+00 : f32
    %551 = vector.broadcast %cst_237 : f32 to vector<8x1xf32>
    %552 = arith.addf %551, %550 : vector<8x1xf32>
    %553 = tpu.reciprocal %552 {approx = true} : vector<8x1xf32> -> vector<8x1xf32>
    %c0_238 = arith.constant 0 : index
    %c0_239 = arith.constant 0 : index
    %554 = vector.load %arg25[%c0_238, %c0_239] : memref<8x1xf32, #tpu.memory_space<vmem>>, vector<8x1xf32>
    tpu.vector_store %arg25[%c0_238, %c0_239], %553 {strides = array<i32>} : memref<8x1xf32, #tpu.memory_space<vmem>>, vector<8x1xf32>,
    return
  }
  func.func @transform_0(%arg0: i32) -> (i32, i32) {
    %c0_i32 = arith.constant 0 : i32
    %c0_i32_0 = arith.constant 0 : i32
    return %arg0, %c0_i32 : i32, i32
  }
  func.func @transform_1(%arg0: i32) -> (i32, i32) {
    %c0_i32 = arith.constant 0 : i32
    %c0_i32_0 = arith.constant 0 : i32
    %c0_i32_1 = arith.constant 0 : i32
    return %c0_i32, %c0_i32_0 : i32, i32
  }
  func.func @transform_2(%arg0: i32) -> (i32, i32) {
    %c0_i32 = arith.constant 0 : i32
    %c0_i32_0 = arith.constant 0 : i32
    %c0_i32_1 = arith.constant 0 : i32
    return %c0_i32, %c0_i32_0 : i32, i32
  }
  func.func @transform_3(%arg0: i32) -> (i32, i32) {
    %c0_i32 = arith.constant 0 : i32
    %c0_i32_0 = arith.constant 0 : i32
    %c0_i32_1 = arith.constant 0 : i32
    return %c0_i32, %c0_i32_0 : i32, i32
  }
  func.func @transform_4(%arg0: i32) -> (i32, i32) {
    %c0_i32 = arith.constant 0 : i32
    %c0_i32_0 = arith.constant 0 : i32
    %c0_i32_1 = arith.constant 0 : i32
    return %c0_i32, %c0_i32_0 : i32, i32
  }
  func.func @transform_5(%arg0: i32) -> (i32, i32) {
    %c0_i32 = arith.constant 0 : i32
    %c0_i32_0 = arith.constant 0 : i32
    %c0_i32_1 = arith.constant 0 : i32
    return %c0_i32, %c0_i32_0 : i32, i32
  }
  func.func @transform_6(%arg0: i32) -> (i32, i32) {
    %c0_i32 = arith.constant 0 : i32
    %c0_i32_0 = arith.constant 0 : i32
    %c0_i32_1 = arith.constant 0 : i32
    return %c0_i32, %c0_i32_0 : i32, i32
  }
  func.func @transform_7(%arg0: i32) -> (i32, i32) {
    %c0_i32 = arith.constant 0 : i32
    %c0_i32_0 = arith.constant 0 : i32
    %c0_i32_1 = arith.constant 0 : i32
    return %c0_i32, %c0_i32_0 : i32, i32
  }
  func.func @transform_8(%arg0: i32) -> (i32, i32) {
    %c0_i32 = arith.constant 0 : i32
    %c0_i32_0 = arith.constant 0 : i32
    %c0_i32_1 = arith.constant 0 : i32
    return %c0_i32, %c0_i32_0 : i32, i32
  }
  func.func @transform_9(%arg0: i32) -> (i32, i32) {
    %c0_i32 = arith.constant 0 : i32
    %c0_i32_0 = arith.constant 0 : i32
    %c0_i32_1 = arith.constant 0 : i32
    return %c0_i32, %c0_i32_0 : i32, i32
  }
  func.func @transform_10(%arg0: i32) -> (i32, i32) {
    %c0_i32 = arith.constant 0 : i32
    %c0_i32_0 = arith.constant 0 : i32
    %c0_i32_1 = arith.constant 0 : i32
    return %c0_i32, %c0_i32_0 : i32, i32
  }
  func.func @transform_11(%arg0: i32) -> (i32, i32) {
    %c0_i32 = arith.constant 0 : i32
    %c0_i32_0 = arith.constant 0 : i32
    %c0_i32_1 = arith.constant 0 : i32
    return %c0_i32, %c0_i32_0 : i32, i32
  }
  func.func @transform_12(%arg0: i32) -> (i32, i32) {
    %c0_i32 = arith.constant 0 : i32
    %c0_i32_0 = arith.constant 0 : i32
    %c0_i32_1 = arith.constant 0 : i32
    return %c0_i32, %c0_i32_0 : i32, i32
  }
  func.func @transform_13(%arg0: i32) -> (i32, i32) {
    %c0_i32 = arith.constant 0 : i32
    %c0_i32_0 = arith.constant 0 : i32
    %c0_i32_1 = arith.constant 0 : i32
    return %c0_i32, %c0_i32_0 : i32, i32
  }
  func.func @transform_14(%arg0: i32) -> (i32, i32) {
    %c0_i32 = arith.constant 0 : i32
    %c0_i32_0 = arith.constant 0 : i32
    %c0_i32_1 = arith.constant 0 : i32
    return %c0_i32, %c0_i32_0 : i32, i32
  }
  func.func @transform_15(%arg0: i32) -> (i32, i32) {
    %c0_i32 = arith.constant 0 : i32
    %c0_i32_0 = arith.constant 0 : i32
    %c0_i32_1 = arith.constant 0 : i32
    return %c0_i32, %c0_i32_0 : i32, i32
  }
  func.func @transform_16(%arg0: i32) -> (i32, i32) {
    %c0_i32 = arith.constant 0 : i32
    %c0_i32_0 = arith.constant 0 : i32
    %c0_i32_1 = arith.constant 0 : i32
    return %c0_i32, %c0_i32_0 : i32, i32
  }
  func.func @transform_17(%arg0: i32) -> (i32, i32) {
    %c0_i32 = arith.constant 0 : i32
    %c0_i32_0 = arith.constant 0 : i32
    %c0_i32_1 = arith.constant 0 : i32
    return %c0_i32, %c0_i32_0 : i32, i32
  }
  func.func @transform_18(%arg0: i32) -> (i32, i32) {
    %c0_i32 = arith.constant 0 : i32
    %c0_i32_0 = arith.constant 0 : i32
    %c0_i32_1 = arith.constant 0 : i32
    return %c0_i32, %c0_i32_0 : i32, i32
  }
  func.func @transform_19(%arg0: i32) -> (i32, i32) {
    %c0_i32 = arith.constant 0 : i32
    %c0_i32_0 = arith.constant 0 : i32
    %c0_i32_1 = arith.constant 0 : i32
    return %c0_i32, %c0_i32_0 : i32, i32
  }
  func.func @transform_20(%arg0: i32) -> (i32, i32) {
    %c0_i32 = arith.constant 0 : i32
    %c0_i32_0 = arith.constant 0 : i32
    %c0_i32_1 = arith.constant 0 : i32
    return %c0_i32, %c0_i32_0 : i32, i32
  }
  func.func @transform_21(%arg0: i32) -> (i32, i32) {
    %c0_i32 = arith.constant 0 : i32
    %c0_i32_0 = arith.constant 0 : i32
    %c0_i32_1 = arith.constant 0 : i32
    return %c0_i32, %c0_i32_0 : i32, i32
  }
  func.func @transform_22(%arg0: i32) -> (i32, i32) {
    %c0_i32 = arith.constant 0 : i32
    %c0_i32_0 = arith.constant 0 : i32
    %c0_i32_1 = arith.constant 0 : i32
    return %c0_i32, %c0_i32_0 : i32, i32
  }
  func.func @transform_23(%arg0: i32) -> (i32, i32) {
    %c0_i32 = arith.constant 0 : i32
    %c0_i32_0 = arith.constant 0 : i32
    %c0_i32_1 = arith.constant 0 : i32
    return %c0_i32, %c0_i32_0 : i32, i32
  }
  func.func @transform_24(%arg0: i32) -> (i32, i32) {
    %c0_i32 = arith.constant 0 : i32
    %c0_i32_0 = arith.constant 0 : i32
    return %arg0, %c0_i32 : i32, i32
  }
}

</mosaic_0001>

<llo_original>
// kernel: time_series_encoder_classifier.1
$region0: #{time_series_encoder_classifier.1}
  #allocation0 [shape = 'u32[]', space=smem, size = 0x4, offset = 0x4, fixed_abs, tag = 'smem constant byte address 0x4 - core index']
  #allocation1 [shape = 'u32[72,128]{1,0:T(1,128)}', space=vmem, size = 0x9000, scoped, tag = 'internal scratch']
  #allocation2 [shape = 'f32[1,1]{1,0:T(1,128)S(1)}', space=vmem, size = 0x200, scoped, tag = 'scoped memory for time_series_encoder_classifier.1']
  %s0 = inlined_call_operand.vmem [shape: f32[8,64], index: 0, kind: input, shape index: {}, may-alias: {0,1}]
  %s1 = inlined_call_operand.vmem [shape: f32[8,64], index: 1, kind: input, shape index: {}, may-alias: {0,1}]
  %s2 = inlined_call_operand.vmem [shape: bf16[16,16], index: 2, kind: input, shape index: {}]
  %s3 = inlined_call_operand.vmem [shape: bf16[16,16], index: 3, kind: input, shape index: {}]
  %s4 = inlined_call_operand.vmem [shape: bf16[16,16], index: 4, kind: input, shape index: {}]
  %s5 = inlined_call_operand.vmem [shape: f32[1,16], index: 5, kind: input, shape index: {}]
  %s6 = inlined_call_operand.vmem [shape: f32[1,16], index: 6, kind: input, shape index: {}]
  %s7 = inlined_call_operand.vmem [shape: f32[1,16], index: 7, kind: input, shape index: {}]
  %s8 = inlined_call_operand.vmem [shape: bf16[16,16], index: 8, kind: input, shape index: {}]
  %s9 = inlined_call_operand.vmem [shape: f32[1,16], index: 9, kind: input, shape index: {}]
  %s10 = inlined_call_operand.vmem [shape: f32[1,16], index: 10, kind: input, shape index: {}]
  %s11 = inlined_call_operand.vmem [shape: f32[1,16], index: 11, kind: input, shape index: {}]
  %s12 = inlined_call_operand.vmem [shape: bf16[16,32], index: 12, kind: input, shape index: {}]
  %s13 = inlined_call_operand.vmem [shape: f32[1,32], index: 13, kind: input, shape index: {}]
  %s14 = inlined_call_operand.vmem [shape: bf16[32,16], index: 14, kind: input, shape index: {}]
  %s15 = inlined_call_operand.vmem [shape: f32[1,16], index: 15, kind: input, shape index: {}]
  %s16 = inlined_call_operand.vmem [shape: f32[1,16], index: 16, kind: input, shape index: {}]
  %s17 = inlined_call_operand.vmem [shape: f32[1,16], index: 17, kind: input, shape index: {}]
  %s18 = inlined_call_operand.vmem [shape: bf16[64,64], index: 18, kind: input, shape index: {}]
  %s19 = inlined_call_operand.vmem [shape: f32[1,64], index: 19, kind: input, shape index: {}]
  %s20 = inlined_call_operand.vmem [shape: f32[1,64], index: 20, kind: input, shape index: {}]
  %s21 = inlined_call_operand.vmem [shape: f32[1,64], index: 21, kind: input, shape index: {}]
  %s22 = inlined_call_operand.vmem [shape: f32[1,64], index: 22, kind: input, shape index: {}]
  %s23 = inlined_call_operand.<no memory space> [shape: f32[1,1], index: 23, kind: input, shape index: {}]
  %s24 = inlined_call_operand.vmem [shape: f32[8,1], index: 24, kind: output, shape index: {}]
  %s25 = sld [smem:[#allocation0]]
  $region106: #{time_series_encoder_classifier.1} parent=0
    _
  %s27 = ssub.s32 1, %s25
  %s28 = scalar_select 0, %s27, %s25
  %v29 = vstv %s23
  %30 = vst [vmem:[#allocation2] sm:$0x1] %v29
  // Predicated region
  $region2: #{time_series_encoder_classifier.1} parent=0 // pred_check
    _
  $region3: #{time_series_encoder_classifier.1} parent=0 // pred_check_branch
    %32 = sbr.rel (0) target = $region5
  $region4: #{time_series_encoder_classifier.1} parent=0 // pred_region
    _
  $region5: #{time_series_encoder_classifier.1} parent=0 // pred_fallthru
    _
  // Predicated region
  $region6: #{time_series_encoder_classifier.1} parent=0 // pred_check
    _
  $region7: #{time_series_encoder_classifier.1} parent=0 // pred_check_branch
    %34 = sbr.rel (0) target = $region9
  $region8: #{time_series_encoder_classifier.1} parent=0 // pred_region
    _
  $region9: #{time_series_encoder_classifier.1} parent=0 // pred_fallthru
    _
  // Predicated region
  $region10: #{time_series_encoder_classifier.1} parent=0 // pred_check
    _
  $region11: #{time_series_encoder_classifier.1} parent=0 // pred_check_branch
    %36 = sbr.rel (0) target = $region13
  $region12: #{time_series_encoder_classifier.1} parent=0 // pred_region
    _
  $region13: #{time_series_encoder_classifier.1} parent=0 // pred_fallthru
    _
  // Predicated region
  $region14: #{time_series_encoder_classifier.1} parent=0 // pred_check
    _
  $region15: #{time_series_encoder_classifier.1} parent=0 // pred_check_branch
    %38 = sbr.rel (0) target = $region17
  $region16: #{time_series_encoder_classifier.1} parent=0 // pred_region
    _
  $region17: #{time_series_encoder_classifier.1} parent=0 // pred_fallthru
    _
  // Predicated region
  $region18: #{time_series_encoder_classifier.1} parent=0 // pred_check
    _
  $region19: #{time_series_encoder_classifier.1} parent=0 // pred_check_branch
    %40 = sbr.rel (0) target = $region21
  $region20: #{time_series_encoder_classifier.1} parent=0 // pred_region
    _
  $region21: #{time_series_encoder_classifier.1} parent=0 // pred_fallthru
    _
  // Predicated region
  $region22: #{time_series_encoder_classifier.1} parent=0 // pred_check
    _
  $region23: #{time_series_encoder_classifier.1} parent=0 // pred_check_branch
    %42 = sbr.rel (0) target = $region25
  $region24: #{time_series_encoder_classifier.1} parent=0 // pred_region
    _
  $region25: #{time_series_encoder_classifier.1} parent=0 // pred_fallthru
    _
  // Predicated region
  $region26: #{time_series_encoder_classifier.1} parent=0 // pred_check
    _
  $region27: #{time_series_encoder_classifier.1} parent=0 // pred_check_branch
    %44 = sbr.rel (0) target = $region29
  $region28: #{time_series_encoder_classifier.1} parent=0 // pred_region
    _
  $region29: #{time_series_encoder_classifier.1} parent=0 // pred_fallthru
    _
  // Predicated region
  $region30: #{time_series_encoder_classifier.1} parent=0 // pred_check
    _
  $region31: #{time_series_encoder_classifier.1} parent=0 // pred_check_branch
    %46 = sbr.rel (0) target = $region33
  $region32: #{time_series_encoder_classifier.1} parent=0 // pred_region
    _
  $region33: #{time_series_encoder_classifier.1} parent=0 // pred_fallthru
    _
  // Predicated region
  $region34: #{time_series_encoder_classifier.1} parent=0 // pred_check
    _
  $region35: #{time_series_encoder_classifier.1} parent=0 // pred_check_branch
    %48 = sbr.rel (0) target = $region37
  $region36: #{time_series_encoder_classifier.1} parent=0 // pred_region
    _
  $region37: #{time_series_encoder_classifier.1} parent=0 // pred_fallthru
    _
  // Predicated region
  $region38: #{time_series_encoder_classifier.1} parent=0 // pred_check
    _
  $region39: #{time_series_encoder_classifier.1} parent=0 // pred_check_branch
    %50 = sbr.rel (0) target = $region41
  $region40: #{time_series_encoder_classifier.1} parent=0 // pred_region
    _
  $region41: #{time_series_encoder_classifier.1} parent=0 // pred_fallthru
    _
  // Predicated region
  $region42: #{time_series_encoder_classifier.1} parent=0 // pred_check
    _
  $region43: #{time_series_encoder_classifier.1} parent=0 // pred_check_branch
    %52 = sbr.rel (0) target = $region45
  $region44: #{time_series_encoder_classifier.1} parent=0 // pred_region
    _
  $region45: #{time_series_encoder_classifier.1} parent=0 // pred_fallthru
    _
  // Predicated region
  $region46: #{time_series_encoder_classifier.1} parent=0 // pred_check
    _
  $region47: #{time_series_encoder_classifier.1} parent=0 // pred_check_branch
    %54 = sbr.rel (0) target = $region49
  $region48: #{time_series_encoder_classifier.1} parent=0 // pred_region
    _
  $region49: #{time_series_encoder_classifier.1} parent=0 // pred_fallthru
    _
  // Predicated region
  $region50: #{time_series_encoder_classifier.1} parent=0 // pred_check
    _
  $region51: #{time_series_encoder_classifier.1} parent=0 // pred_check_branch
    %56 = sbr.rel (0) target = $region53
  $region52: #{time_series_encoder_classifier.1} parent=0 // pred_region
    _
  $region53: #{time_series_encoder_classifier.1} parent=0 // pred_fallthru
    _
  // Predicated region
  $region54: #{time_series_encoder_classifier.1} parent=0 // pred_check
    _
  $region55: #{time_series_encoder_classifier.1} parent=0 // pred_check_branch
    %58 = sbr.rel (0) target = $region57
  $region56: #{time_series_encoder_classifier.1} parent=0 // pred_region
    _
  $region57: #{time_series_encoder_classifier.1} parent=0 // pred_fallthru
    _
  // Predicated region
  $region58: #{time_series_encoder_classifier.1} parent=0 // pred_check
    _
  $region59: #{time_series_encoder_classifier.1} parent=0 // pred_check_branch
    %60 = sbr.rel (0) target = $region61
  $region60: #{time_series_encoder_classifier.1} parent=0 // pred_region
    _
  $region61: #{time_series_encoder_classifier.1} parent=0 // pred_fallthru
    _
  // Predicated region
  $region62: #{time_series_encoder_classifier.1} parent=0 // pred_check
    _
  $region63: #{time_series_encoder_classifier.1} parent=0 // pred_check_branch
    %62 = sbr.rel (0) target = $region65
  $region64: #{time_series_encoder_classifier.1} parent=0 // pred_region
    _
  $region65: #{time_series_encoder_classifier.1} parent=0 // pred_fallthru
    _
  // Predicated region
  $region66: #{time_series_encoder_classifier.1} parent=0 // pred_check
    _
  $region67: #{time_series_encoder_classifier.1} parent=0 // pred_check_branch
    %64 = sbr.rel (0) target = $region69
  $region68: #{time_series_encoder_classifier.1} parent=0 // pred_region
    _
  $region69: #{time_series_encoder_classifier.1} parent=0 // pred_fallthru
    _
  // Predicated region
  $region70: #{time_series_encoder_classifier.1} parent=0 // pred_check
    _
  $region71: #{time_series_encoder_classifier.1} parent=0 // pred_check_branch
    %66 = sbr.rel (0) target = $region73
  $region72: #{time_series_encoder_classifier.1} parent=0 // pred_region
    _
  $region73: #{time_series_encoder_classifier.1} parent=0 // pred_fallthru
    _
  // Predicated region
  $region74: #{time_series_encoder_classifier.1} parent=0 // pred_check
    _
  $region75: #{time_series_encoder_classifier.1} parent=0 // pred_check_branch
    %68 = sbr.rel (0) target = $region77
  $region76: #{time_series_encoder_classifier.1} parent=0 // pred_region
    _
  $region77: #{time_series_encoder_classifier.1} parent=0 // pred_fallthru
    _
  // Predicated region
  $region78: #{time_series_encoder_classifier.1} parent=0 // pred_check
    _
  $region79: #{time_series_encoder_classifier.1} parent=0 // pred_check_branch
    %70 = sbr.rel (0) target = $region81
  $region80: #{time_series_encoder_classifier.1} parent=0 // pred_region
    _
  $region81: #{time_series_encoder_classifier.1} parent=0 // pred_fallthru
    _
  // Predicated region
  $region82: #{time_series_encoder_classifier.1} parent=0 // pred_check
    _
  $region83: #{time_series_encoder_classifier.1} parent=0 // pred_check_branch
    %72 = sbr.rel (0) target = $region85
  $region84: #{time_series_encoder_classifier.1} parent=0 // pred_region
    _
  $region85: #{time_series_encoder_classifier.1} parent=0 // pred_fallthru
    _
  // Predicated region
  $region86: #{time_series_encoder_classifier.1} parent=0 // pred_check
    _
  $region87: #{time_series_encoder_classifier.1} parent=0 // pred_check_branch
    %74 = sbr.rel (0) target = $region89
  $region88: #{time_series_encoder_classifier.1} parent=0 // pred_region
    _
  $region89: #{time_series_encoder_classifier.1} parent=0 // pred_fallthru
    _
  // Predicated region
  $region90: #{time_series_encoder_classifier.1} parent=0 // pred_check
    _
  $region91: #{time_series_encoder_classifier.1} parent=0 // pred_check_branch
    %76 = sbr.rel (0) target = $region93
  $region92: #{time_series_encoder_classifier.1} parent=0 // pred_region
    _
  $region93: #{time_series_encoder_classifier.1} parent=0 // pred_fallthru
    _
  // Predicated region
  $region94: #{time_series_encoder_classifier.1} parent=0 // pred_check
    _
  $region95: #{time_series_encoder_classifier.1} parent=0 // pred_check_branch
    %78 = sbr.rel (0) target = $region97
  $region96: #{time_series_encoder_classifier.1} parent=0 // pred_region
    _
  $region97: #{time_series_encoder_classifier.1} parent=0 // pred_fallthru
    _
  %v80 = vld [vmem:[%s0] sm:$0xff]
  %v81 = vld [vmem:[%s1] sm:$0xff]
  %v82 = vpack.c.bf16 %v80, %v80
  %v83 = vpack.c.bf16 %v81, %v81
  %v84 = vld [vmem:[%s2] sm:$0xf]
  %v85 = vld [vmem:[%s2 + $0x4] sm:$0xf]
  %v86 = vld [vmem:[%s5] sm:$0x1]
  %v88 = vperm.slane %v86, 0
  %v92 = vunpack.c.l.b16 %v84
  %v93 = vunpack.c.l.b16 %v85
  %v94 = vpack.c.b16 %v93, %v92
  %vm96 = vcmask 130048
  %v98 = vsel %vm96, %v82, 0
  %100 = vmatpush.bf16.msra.mxu0 0
  %101 = vmatpush.bf16.msra.mxu0 0
  %102 = vmatpush.bf16.msra.mxu0 0
  %103 = vmatpush.bf16.msra.mxu0 0
  %104 = vmatpush.bf16.msra.mxu0 0
  %105 = vmatpush.bf16.msra.mxu0 0
  %106 = vmatpush.bf16.msra.mxu0 0
  %107 = vmatpush.bf16.msra.mxu0 %v94
  %108 = vmatmul.bf16.gmra.mxu0 %v98
  %v109 = vpop.f32.mrf.mxu0
  %v110 = vadd.f32 %v88, %v109
  %v111 = vpop.f32.mrf.mxu0
  %112 = vdwg.mxu0
  %v113 = vpack.c.bf16 %v110, %v110
  %v114 = vld [vmem:[%s3] sm:$0xf]
  %v115 = vld [vmem:[%s3 + $0x4] sm:$0xf]
  %v116 = vld [vmem:[%s6] sm:$0x1]
  %v118 = vperm.slane %v116, 0
  %v122 = vunpack.c.l.b16 %v114
  %v123 = vunpack.c.l.b16 %v115
  %v124 = vpack.c.b16 %v123, %v122
  %v127 = vsel %vm96, %v83, 0
  %129 = vmatpush.bf16.msra.mxu0 0
  %130 = vmatpush.bf16.msra.mxu0 0
  %131 = vmatpush.bf16.msra.mxu0 0
  %132 = vmatpush.bf16.msra.mxu0 0
  %133 = vmatpush.bf16.msra.mxu0 0
  %134 = vmatpush.bf16.msra.mxu0 0
  %135 = vmatpush.bf16.msra.mxu0 0
  %136 = vmatpush.bf16.msra.mxu0 %v124
  %137 = vmatmul.bf16.gmra.mxu0 %v127
  %v138 = vpop.f32.mrf.mxu0
  %v139 = vadd.f32 %v118, %v138
  %v140 = vpop.f32.mrf.mxu0
  %141 = vdwg.mxu0
  %v142 = vpack.c.bf16 %v139, %v139
  %v143 = vld [vmem:[%s4] sm:$0xf]
  %v144 = vld [vmem:[%s4 + $0x4] sm:$0xf]
  %v145 = vld [vmem:[%s7] sm:$0x1]
  %v147 = vperm.slane %v145, 0
  %v151 = vunpack.c.l.b16 %v143
  %v152 = vunpack.c.l.b16 %v144
  %v153 = vpack.c.b16 %v152, %v151
  %155 = vmatpush.bf16.msra.mxu0 0
  %156 = vmatpush.bf16.msra.mxu0 0
  %157 = vmatpush.bf16.msra.mxu0 0
  %158 = vmatpush.bf16.msra.mxu0 0
  %159 = vmatpush.bf16.msra.mxu0 0
  %160 = vmatpush.bf16.msra.mxu0 0
  %161 = vmatpush.bf16.msra.mxu0 0
  %162 = vmatpush.bf16.msra.mxu0 %v153
  %163 = vmatmul.bf16.gmra.mxu0 %v127
  %v164 = vpop.f32.mrf.mxu0
  %v165 = vadd.f32 %v147, %v164
  %v166 = vpop.f32.mrf.mxu0
  %167 = vdwg.mxu0
  %v168 = vpack.c.bf16 %v165, %v165
  %v170 = vsel %vm96, %v113, 0
  %v173 = vsel %vm96, %v142, 0
  %175 = vmatpush.bf16.xpose.msra.mxu0 0
  %176 = vmatpush.bf16.xpose.msra.mxu0 0
  %177 = vmatpush.bf16.xpose.msra.mxu0 0
  %178 = vmatpush.bf16.xpose.msra.mxu0 0
  %179 = vmatpush.bf16.xpose.msra.mxu0 0
  %180 = vmatpush.bf16.xpose.msra.mxu0 0
  %181 = vmatpush.bf16.xpose.msra.mxu0 0
  %182 = vmatpush.bf16.xpose.msra.mxu0 %v173
  %183 = vmatmul.bf16.gmra.mxu0 %v170
  %v184 = vpop.f32.mrf.mxu0
  %v185 = vadd.f32 0.0, %v184
  %v186 = vpop.f32.mrf.mxu0
  %187 = vdwg.mxu0
  %vm188 = vcmask 64512
  %v189 = vsel %vm188, %v185, -inf
  %190 = vmax.xlane.f32.xlu0 %v189
  %v191 = vpop.xlane.xlu0 %190
  %v192 = vsub.f32 %v185, %v191
  %v193 = vmul.f32 %v192, 1.442695
  %v194 = vpow.pop %v193
  %v195 = vsel %vm188, %v194, 0.0
  %196 = vadd.xlane.f32.xlu0 %v195
  %v197 = vpop.xlane.xlu0 %196
  %v198 = vrcp.pop %v197
  %v199 = vmul.f32 %v194, %v198
  %v200 = vpack.c.bf16 %v199, %v199
  %v202 = vsel %vm188, %v200, 0
  %vm204 = vcmask 1043456
  %v206 = vsel %vm204, %v168, 0
  %208 = vmatpush.bf16.msra.mxu0 0
  %209 = vmatpush.bf16.msra.mxu0 0
  %210 = vmatpush.bf16.msra.mxu0 0
  %211 = vmatpush.bf16.msra.mxu0 0
  %212 = vmatpush.bf16.msra.mxu0 0
  %213 = vmatpush.bf16.msra.mxu0 0
  %214 = vmatpush.bf16.msra.mxu0 0
  %215 = vmatpush.bf16.msra.mxu0 %v206
  %216 = vmatmul.bf16.gmra.mxu0 %v202
  %v217 = vpop.f32.mrf.mxu0
  %v218 = vadd.f32 0.0, %v217
  %v219 = vpop.f32.mrf.mxu0
  %220 = vdwg.mxu0
  %v221 = vpack.c.bf16 %v218, %v218
  %v222 = vld [vmem:[%s8] sm:$0xf]
  %v223 = vld [vmem:[%s8 + $0x4] sm:$0xf]
  %v224 = vld [vmem:[%s9] sm:$0x1]
  %v226 = vperm.slane %v224, 0
  %v230 = vunpack.c.l.b16 %v222
  %v231 = vunpack.c.l.b16 %v223
  %v232 = vpack.c.b16 %v231, %v230
  %v235 = vsel %vm96, %v221, 0
  %237 = vmatpush.bf16.msra.mxu0 0
  %238 = vmatpush.bf16.msra.mxu0 0
  %239 = vmatpush.bf16.msra.mxu0 0
  %240 = vmatpush.bf16.msra.mxu0 0
  %241 = vmatpush.bf16.msra.mxu0 0
  %242 = vmatpush.bf16.msra.mxu0 0
  %243 = vmatpush.bf16.msra.mxu0 0
  %244 = vmatpush.bf16.msra.mxu0 %v232
  %245 = vmatmul.bf16.gmra.mxu0 %v235
  %v246 = vpop.f32.mrf.mxu0
  %v247 = vadd.f32 %v226, %v246
  %v248 = vpop.f32.mrf.mxu0
  %249 = vdwg.mxu0
  %v250 = vadd.f32 %v80, %v247
  %v251 = vld [vmem:[%s10] sm:$0x1]
  %v252 = vld [vmem:[%s11] sm:$0x1]
  %v253 = vsel %vm96, %v250, 0.0
  %254 = vadd.xlane.f32.xlu0 %v253
  %v255 = vpop.xlane.xlu0 %254
  %v256 = vrcp.pop 16.0
  %v257 = vmul.f32 16.0, %v256
  %v258 = vsub.f32 1.0, %v257
  %v259 = vmul.f32 %v256, %v258
  %v260 = vadd.f32 %v256, %v259
  %vm261 = vweird.f32 %v256
  %v262 = vsel %vm261, %v256, %v260
  %v263 = vmul.f32 %v255, %v262
  %v264 = vsub.f32 %v250, %v263
  %v265 = vmul.f32 %v264, %v264
  %v266 = vsel %vm96, %v265, 0.0
  %267 = vadd.xlane.f32.xlu0 %v266
  %v268 = vpop.xlane.xlu0 %267
  %v269 = vmul.f32 %v268, %v262
  %v270 = vadd.f32 %v269, 1e-05
  %v271 = vrsqrt.pop %v270
  %v272 = vmul.f32 %v271, %v270
  %v273 = vmul.f32 %v272, %v271
  %v274 = vmul.f32 0.5, %v273
  %v275 = vsub.f32 1.5, %v274
  %v276 = vmul.f32 %v271, %v275
  %vm277 = vweird.f32 %v270
  %vm278 = vweird.f32 %v271
  %vm279 = vmor %vm277, %vm278
  %v280 = vsel %vm279, %v271, %v276
  %v281 = vmul.f32 %v264, %v280
  %v283 = vperm.slane %v251, 0
  %v285 = vmul.f32 %v281, %v283
  %v287 = vperm.slane %v252, 0
  %v289 = vadd.f32 %v285, %v287
  %v290 = vpack.c.bf16 %v289, %v289
  %v291 = vld [vmem:[%s12] sm:$0xf]
  %v292 = vld [vmem:[%s12 + $0x4] sm:$0xf]
  %v293 = vld [vmem:[%s13] sm:$0x1]
  %v295 = vperm.slane %v293, 0
  %v299 = vunpack.c.l.b16 %v291
  %v300 = vunpack.c.l.b16 %v292
  %v301 = vpack.c.b16 %v300, %v299
  %v304 = vsel %vm96, %v290, 0
  %306 = vmatpush.bf16.msra.mxu0 0
  %307 = vmatpush.bf16.msra.mxu0 0
  %308 = vmatpush.bf16.msra.mxu0 0
  %309 = vmatpush.bf16.msra.mxu0 0
  %310 = vmatpush.bf16.msra.mxu0 0
  %311 = vmatpush.bf16.msra.mxu0 0
  %312 = vmatpush.bf16.msra.mxu0 0
  %313 = vmatpush.bf16.msra.mxu0 %v301
  %314 = vmatmul.bf16.gmra.mxu0 %v304
  %v315 = vpop.f32.mrf.mxu0
  %v316 = vadd.f32 %v295, %v315
  %v317 = vpop.f32.mrf.mxu0
  %318 = vdwg.mxu0
  %v319 = vmax.f32 %v316, 0.0
  %v320 = vpack.c.bf16 %v319, %v319
  %v321 = vld [vmem:[%s14] sm:$0xf]
  %v322 = vld [vmem:[%s14 + $0x4] sm:$0xf]
  %v323 = vld [vmem:[%s14 + $0x8] sm:$0xf]
  %v324 = vld [vmem:[%s14 + $0xc] sm:$0xf]
  %v325 = vld [vmem:[%s15] sm:$0x1]
  %v327 = vperm.slane %v325, 0
  %v333 = vunpack.c.l.b16 %v321
  %v334 = vunpack.c.l.b16 %v322
  %v335 = vunpack.c.l.b16 %v323
  %v336 = vunpack.c.l.b16 %v324
  %v337 = vpack.c.b16 %v334, %v333
  %v338 = vpack.c.b16 %v336, %v335
  %vm341 = vcmask 261120
  %v343 = vsel %vm341, %v320, 0
  %345 = vmatpush.bf16.msra.mxu0 0
  %346 = vmatpush.bf16.msra.mxu0 0
  %347 = vmatpush.bf16.msra.mxu0 0
  %348 = vmatpush.bf16.msra.mxu0 0
  %349 = vmatpush.bf16.msra.mxu0 0
  %350 = vmatpush.bf16.msra.mxu0 0
  %351 = vmatpush.bf16.msra.mxu0 %v338
  %352 = vmatpush.bf16.msra.mxu0 %v337
  %353 = vmatmul.bf16.gmra.mxu0 %v343
  %v354 = vpop.f32.mrf.mxu0
  %v355 = vadd.f32 %v327, %v354
  %v356 = vpop.f32.mrf.mxu0
  %357 = vdwg.mxu0
  %v358 = vadd.f32 %v289, %v355
  %v359 = vld [vmem:[%s16] sm:$0x1]
  %v360 = vld [vmem:[%s17] sm:$0x1]
  %v361 = vsel %vm96, %v358, 0.0
  %362 = vadd.xlane.f32.xlu0 %v361
  %v363 = vpop.xlane.xlu0 %362
  %v364 = vmul.f32 %v363, %v262
  %v365 = vsub.f32 %v358, %v364
  %v366 = vmul.f32 %v365, %v365
  %v367 = vsel %vm96, %v366, 0.0
  %368 = vadd.xlane.f32.xlu0 %v367
  %v369 = vpop.xlane.xlu0 %368
  %v370 = vmul.f32 %v369, %v262
  %v371 = vadd.f32 %v370, 1e-05
  %v372 = vrsqrt.pop %v371
  %v373 = vmul.f32 %v372, %v371
  %v374 = vmul.f32 %v373, %v372
  %v375 = vmul.f32 0.5, %v374
  %v376 = vsub.f32 1.5, %v375
  %v377 = vmul.f32 %v372, %v376
  %vm378 = vweird.f32 %v371
  %vm379 = vweird.f32 %v372
  %vm380 = vmor %vm378, %vm379
  %v381 = vsel %vm380, %v372, %v377
  %v382 = vmul.f32 %v365, %v381
  %v384 = vperm.slane %v359, 0
  %v386 = vmul.f32 %v382, %v384
  %v388 = vperm.slane %v360, 0
  %v390 = vadd.f32 %v386, %v388
  %v391 = vpack.c.bf16 %v390, %v390
  %v392 = vld [vmem:[%s18] sm:$0xf]
  %v393 = vld [vmem:[%s18 + $0x4] sm:$0xf]
  %395 = vrot.lane.b32.xlu0 %v82, 112
  %v396 = vpop.permute.xlu0 %395
  %v398 = vsel %vm96, %v396, 0
  %400 = vmatpush.bf16.msra.mxu0 0
  %401 = vmatpush.bf16.msra.mxu0 0
  %402 = vmatpush.bf16.msra.mxu0 0
  %403 = vmatpush.bf16.msra.mxu0 0
  %404 = vmatpush.bf16.msra.mxu0 0
  %405 = vmatpush.bf16.msra.mxu0 0
  %406 = vmatpush.bf16.msra.mxu0 0
  %407 = vmatpush.bf16.msra.mxu0 %v94
  %408 = vmatmul.bf16.gmra.mxu0 %v398
  %v409 = vpop.f32.mrf.mxu0
  %v410 = vadd.f32 %v88, %v409
  %v411 = vpop.f32.mrf.mxu0
  %412 = vdwg.mxu0
  %v413 = vpack.c.bf16 %v410, %v410
  %415 = vrot.lane.b32.xlu0 %v83, 112
  %v416 = vpop.permute.xlu0 %415
  %v418 = vsel %vm96, %v416, 0
  %420 = vmatpush.bf16.msra.mxu0 0
  %421 = vmatpush.bf16.msra.mxu0 0
  %422 = vmatpush.bf16.msra.mxu0 0
  %423 = vmatpush.bf16.msra.mxu0 0
  %424 = vmatpush.bf16.msra.mxu0 0
  %425 = vmatpush.bf16.msra.mxu0 0
  %426 = vmatpush.bf16.msra.mxu0 0
  %427 = vmatpush.bf16.msra.mxu0 %v124
  %428 = vmatmul.bf16.gmra.mxu0 %v418
  %v429 = vpop.f32.mrf.mxu0
  %v430 = vadd.f32 %v118, %v429
  %v431 = vpop.f32.mrf.mxu0
  %432 = vdwg.mxu0
  %v433 = vpack.c.bf16 %v430, %v430
  %434 = vmatpush.bf16.msra.mxu0 0
  %435 = vmatpush.bf16.msra.mxu0 0
  %436 = vmatpush.bf16.msra.mxu0 0
  %437 = vmatpush.bf16.msra.mxu0 0
  %438 = vmatpush.bf16.msra.mxu0 0
  %439 = vmatpush.bf16.msra.mxu0 0
  %440 = vmatpush.bf16.msra.mxu0 0
  %441 = vmatpush.bf16.msra.mxu0 %v153
  %442 = vmatmul.bf16.gmra.mxu0 %v418
  %v443 = vpop.f32.mrf.mxu0
  %v444 = vadd.f32 %v147, %v443
  %v445 = vpop.f32.mrf.mxu0
  %446 = vdwg.mxu0
  %v447 = vpack.c.bf16 %v444, %v444
  %v449 = vsel %vm96, %v413, 0
  %v452 = vsel %vm96, %v433, 0
  %454 = vmatpush.bf16.xpose.msra.mxu0 0
  %455 = vmatpush.bf16.xpose.msra.mxu0 0
  %456 = vmatpush.bf16.xpose.msra.mxu0 0
  %457 = vmatpush.bf16.xpose.msra.mxu0 0
  %458 = vmatpush.bf16.xpose.msra.mxu0 0
  %459 = vmatpush.bf16.xpose.msra.mxu0 0
  %460 = vmatpush.bf16.xpose.msra.mxu0 0
  %461 = vmatpush.bf16.xpose.msra.mxu0 %v452
  %462 = vmatmul.bf16.gmra.mxu0 %v449
  %v463 = vpop.f32.mrf.mxu0
  %v464 = vadd.f32 0.0, %v463
  %v465 = vpop.f32.mrf.mxu0
  %466 = vdwg.mxu0
  %v467 = vsel %vm188, %v464, -inf
  %468 = vmax.xlane.f32.xlu0 %v467
  %v469 = vpop.xlane.xlu0 %468
  %v470 = vsub.f32 %v464, %v469
  %v471 = vmul.f32 %v470, 1.442695
  %v472 = vpow.pop %v471
  %v473 = vsel %vm188, %v472, 0.0
  %474 = vadd.xlane.f32.xlu0 %v473
  %v475 = vpop.xlane.xlu0 %474
  %v476 = vrcp.pop %v475
  %v477 = vmul.f32 %v472, %v476
  %v478 = vpack.c.bf16 %v477, %v477
  %v480 = vsel %vm188, %v478, 0
  %v483 = vsel %vm204, %v447, 0
  %485 = vmatpush.bf16.msra.mxu0 0
  %486 = vmatpush.bf16.msra.mxu0 0
  %487 = vmatpush.bf16.msra.mxu0 0
  %488 = vmatpush.bf16.msra.mxu0 0
  %489 = vmatpush.bf16.msra.mxu0 0
  %490 = vmatpush.bf16.msra.mxu0 0
  %491 = vmatpush.bf16.msra.mxu0 0
  %492 = vmatpush.bf16.msra.mxu0 %v483
  %493 = vmatmul.bf16.gmra.mxu0 %v480
  %v494 = vpop.f32.mrf.mxu0
  %v495 = vadd.f32 0.0, %v494
  %v496 = vpop.f32.mrf.mxu0
  %497 = vdwg.mxu0
  %v498 = vpack.c.bf16 %v495, %v495
  %v500 = vsel %vm96, %v498, 0
  %502 = vmatpush.bf16.msra.mxu0 0
  %503 = vmatpush.bf16.msra.mxu0 0
  %504 = vmatpush.bf16.msra.mxu0 0
  %505 = vmatpush.bf16.msra.mxu0 0
  %506 = vmatpush.bf16.msra.mxu0 0
  %507 = vmatpush.bf16.msra.mxu0 0
  %508 = vmatpush.bf16.msra.mxu0 0
  %509 = vmatpush.bf16.msra.mxu0 %v232
  %510 = vmatmul.bf16.gmra.mxu0 %v500
  %v511 = vpop.f32.mrf.mxu0
  %v512 = vadd.f32 %v226, %v511
  %v513 = vpop.f32.mrf.mxu0
  %514 = vdwg.mxu0
  %516 = vrot.lane.b32.xlu0 %v512, 16
  %v517 = vpop.permute.xlu0 %516
  %v519 = vadd.f32 %v80, %v517
  %521 = vrot.lane.b32.xlu0 %v519, 112
  %v522 = vpop.permute.xlu0 %521
  %v524 = vsel %vm96, %v522, 0.0
  %525 = vadd.xlane.f32.xlu0 %v524
  %v526 = vpop.xlane.xlu0 %525
  %v527 = vmul.f32 %v526, %v262
  %v528 = vsub.f32 %v519, %v527
  %v529 = vmul.f32 %v528, %v528
  %531 = vrot.lane.b32.xlu0 %v529, 112
  %v532 = vpop.permute.xlu0 %531
  %v534 = vsel %vm96, %v532, 0.0
  %535 = vadd.xlane.f32.xlu0 %v534
  %v536 = vpop.xlane.xlu0 %535
  %v537 = vmul.f32 %v536, %v262
  %v538 = vadd.f32 %v537, 1e-05
  %v539 = vrsqrt.pop %v538
  %v540 = vmul.f32 %v539, %v538
  %v541 = vmul.f32 %v540, %v539
  %v542 = vmul.f32 0.5, %v541
  %v543 = vsub.f32 1.5, %v542
  %v544 = vmul.f32 %v539, %v543
  %vm545 = vweird.f32 %v538
  %vm546 = vweird.f32 %v539
  %vm547 = vmor %vm545, %vm546
  %v548 = vsel %vm547, %v539, %v544
  %v549 = vmul.f32 %v528, %v548
  %550 = vrot.lane.b32.xlu0 %v283, 16
  %v551 = vpop.permute.xlu0 %550
  %v553 = vmul.f32 %v549, %v551
  %554 = vrot.lane.b32.xlu0 %v287, 16
  %v555 = vpop.permute.xlu0 %554
  %v557 = vadd.f32 %v553, %v555
  %v558 = vpack.c.bf16 %v557, %v557
  %560 = vrot.lane.b32.xlu0 %v558, 112
  %v561 = vpop.permute.xlu0 %560
  %v563 = vsel %vm96, %v561, 0
  %565 = vmatpush.bf16.msra.mxu0 0
  %566 = vmatpush.bf16.msra.mxu0 0
  %567 = vmatpush.bf16.msra.mxu0 0
  %568 = vmatpush.bf16.msra.mxu0 0
  %569 = vmatpush.bf16.msra.mxu0 0
  %570 = vmatpush.bf16.msra.mxu0 0
  %571 = vmatpush.bf16.msra.mxu0 0
  %572 = vmatpush.bf16.msra.mxu0 %v301
  %573 = vmatmul.bf16.gmra.mxu0 %v563
  %v574 = vpop.f32.mrf.mxu0
  %v575 = vadd.f32 %v295, %v574
  %v576 = vpop.f32.mrf.mxu0
  %577 = vdwg.mxu0
  %v578 = vmax.f32 %v575, 0.0
  %v579 = vpack.c.bf16 %v578, %v578
  %v581 = vsel %vm341, %v579, 0
  %583 = vmatpush.bf16.msra.mxu0 0
  %584 = vmatpush.bf16.msra.mxu0 0
  %585 = vmatpush.bf16.msra.mxu0 0
  %586 = vmatpush.bf16.msra.mxu0 0
  %587 = vmatpush.bf16.msra.mxu0 0
  %588 = vmatpush.bf16.msra.mxu0 0
  %589 = vmatpush.bf16.msra.mxu0 %v338
  %590 = vmatpush.bf16.msra.mxu0 %v337
  %591 = vmatmul.bf16.gmra.mxu0 %v581
  %v592 = vpop.f32.mrf.mxu0
  %v593 = vadd.f32 %v327, %v592
  %v594 = vpop.f32.mrf.mxu0
  %595 = vdwg.mxu0
  %597 = vrot.lane.b32.xlu0 %v593, 16
  %v598 = vpop.permute.xlu0 %597
  %v600 = vadd.f32 %v557, %v598
  %602 = vrot.lane.b32.xlu0 %v600, 112
  %v603 = vpop.permute.xlu0 %602
  %v605 = vsel %vm96, %v603, 0.0
  %606 = vadd.xlane.f32.xlu0 %v605
  %v607 = vpop.xlane.xlu0 %606
  %v608 = vmul.f32 %v607, %v262
  %v609 = vsub.f32 %v600, %v608
  %v610 = vmul.f32 %v609, %v609
  %612 = vrot.lane.b32.xlu0 %v610, 112
  %v613 = vpop.permute.xlu0 %612
  %v615 = vsel %vm96, %v613, 0.0
  %616 = vadd.xlane.f32.xlu0 %v615
  %v617 = vpop.xlane.xlu0 %616
  %v618 = vmul.f32 %v617, %v262
  %v619 = vadd.f32 %v618, 1e-05
  %v620 = vrsqrt.pop %v619
  %v621 = vmul.f32 %v620, %v619
  %v622 = vmul.f32 %v621, %v620
  %v623 = vmul.f32 0.5, %v622
  %v624 = vsub.f32 1.5, %v623
  %v625 = vmul.f32 %v620, %v624
  %vm626 = vweird.f32 %v619
  %vm627 = vweird.f32 %v620
  %vm628 = vmor %vm626, %vm627
  %v629 = vsel %vm628, %v620, %v625
  %v630 = vmul.f32 %v609, %v629
  %631 = vrot.lane.b32.xlu0 %v384, 16
  %v632 = vpop.permute.xlu0 %631
  %v634 = vmul.f32 %v630, %v632
  %635 = vrot.lane.b32.xlu0 %v388, 16
  %v636 = vpop.permute.xlu0 %635
  %v638 = vadd.f32 %v634, %v636
  %v639 = vpack.c.bf16 %v638, %v638
  %v640 = vld [vmem:[%s18 + $0x8] sm:$0xf]
  %v641 = vld [vmem:[%s18 + $0xc] sm:$0xf]
  %643 = vrot.lane.b32.xlu0 %v639, 112
  %v644 = vpop.permute.xlu0 %643
  %v647 = vunpack.c.l.b16 %v640
  %v648 = vunpack.c.l.b16 %v641
  %v649 = vpack.c.b16 %v648, %v647
  %v652 = vsel %vm96, %v644, 0
  %654 = vmatpush.bf16.msra.mxu0 0
  %655 = vmatpush.bf16.msra.mxu0 0
  %656 = vmatpush.bf16.msra.mxu0 0
  %657 = vmatpush.bf16.msra.mxu0 0
  %658 = vmatpush.bf16.msra.mxu0 0
  %659 = vmatpush.bf16.msra.mxu0 0
  %660 = vmatpush.bf16.msra.mxu0 0
  %661 = vmatpush.bf16.msra.mxu0 %v649
  %662 = vmatmul.bf16.gmra.mxu0 %v652
  %v663 = vpop.f32.mrf.mxu0
  %v664 = vadd.f32 0.0, %v663
  %v665 = vpop.f32.mrf.mxu0
  %666 = vdwg.mxu0
  %v669 = vunpack.c.l.b16 %v392
  %v670 = vunpack.c.l.b16 %v393
  %v671 = vpack.c.b16 %v670, %v669
  %v674 = vsel %vm96, %v391, 0
  %676 = vmatpush.bf16.msra.mxu0 0
  %677 = vmatpush.bf16.msra.mxu0 0
  %678 = vmatpush.bf16.msra.mxu0 0
  %679 = vmatpush.bf16.msra.mxu0 0
  %680 = vmatpush.bf16.msra.mxu0 0
  %681 = vmatpush.bf16.msra.mxu0 0
  %682 = vmatpush.bf16.msra.mxu0 0
  %683 = vmatpush.bf16.msra.mxu0 %v671
  %684 = vmatmul.bf16.gmra.mxu0 %v674
  %v685 = vpop.f32.mrf.mxu0
  %v686 = vadd.f32 %v664, %v685
  %v687 = vpop.f32.mrf.mxu0
  %688 = vdwg.mxu0
  %689 = vrot.lane.b32.xlu0 %v82, 96
  %v690 = vpop.permute.xlu0 %689
  %v692 = vsel %vm96, %v690, 0
  %694 = vmatpush.bf16.msra.mxu0 0
  %695 = vmatpush.bf16.msra.mxu0 0
  %696 = vmatpush.bf16.msra.mxu0 0
  %697 = vmatpush.bf16.msra.mxu0 0
  %698 = vmatpush.bf16.msra.mxu0 0
  %699 = vmatpush.bf16.msra.mxu0 0
  %700 = vmatpush.bf16.msra.mxu0 0
  %701 = vmatpush.bf16.msra.mxu0 %v94
  %702 = vmatmul.bf16.gmra.mxu0 %v692
  %v703 = vpop.f32.mrf.mxu0
  %v704 = vadd.f32 %v88, %v703
  %v705 = vpop.f32.mrf.mxu0
  %706 = vdwg.mxu0
  %v707 = vpack.c.bf16 %v704, %v704
  %708 = vrot.lane.b32.xlu0 %v83, 96
  %v709 = vpop.permute.xlu0 %708
  %v711 = vsel %vm96, %v709, 0
  %713 = vmatpush.bf16.msra.mxu0 0
  %714 = vmatpush.bf16.msra.mxu0 0
  %715 = vmatpush.bf16.msra.mxu0 0
  %716 = vmatpush.bf16.msra.mxu0 0
  %717 = vmatpush.bf16.msra.mxu0 0
  %718 = vmatpush.bf16.msra.mxu0 0
  %719 = vmatpush.bf16.msra.mxu0 0
  %720 = vmatpush.bf16.msra.mxu0 %v124
  %721 = vmatmul.bf16.gmra.mxu0 %v711
  %v722 = vpop.f32.mrf.mxu0
  %v723 = vadd.f32 %v118, %v722
  %v724 = vpop.f32.mrf.mxu0
  %725 = vdwg.mxu0
  %v726 = vpack.c.bf16 %v723, %v723
  %727 = vmatpush.bf16.msra.mxu0 0
  %728 = vmatpush.bf16.msra.mxu0 0
  %729 = vmatpush.bf16.msra.mxu0 0
  %730 = vmatpush.bf16.msra.mxu0 0
  %731 = vmatpush.bf16.msra.mxu0 0
  %732 = vmatpush.bf16.msra.mxu0 0
  %733 = vmatpush.bf16.msra.mxu0 0
  %734 = vmatpush.bf16.msra.mxu0 %v153
  %735 = vmatmul.bf16.gmra.mxu0 %v711
  %v736 = vpop.f32.mrf.mxu0
  %v737 = vadd.f32 %v147, %v736
  %v738 = vpop.f32.mrf.mxu0
  %739 = vdwg.mxu0
  %v740 = vpack.c.bf16 %v737, %v737
  %v742 = vsel %vm96, %v707, 0
  %v745 = vsel %vm96, %v726, 0
  %747 = vmatpush.bf16.xpose.msra.mxu0 0
  %748 = vmatpush.bf16.xpose.msra.mxu0 0
  %749 = vmatpush.bf16.xpose.msra.mxu0 0
  %750 = vmatpush.bf16.xpose.msra.mxu0 0
  %751 = vmatpush.bf16.xpose.msra.mxu0 0
  %752 = vmatpush.bf16.xpose.msra.mxu0 0
  %753 = vmatpush.bf16.xpose.msra.mxu0 0
  %754 = vmatpush.bf16.xpose.msra.mxu0 %v745
  %755 = vmatmul.bf16.gmra.mxu0 %v742
  %v756 = vpop.f32.mrf.mxu0
  %v757 = vadd.f32 0.0, %v756
  %v758 = vpop.f32.mrf.mxu0
  %759 = vdwg.mxu0
  %v760 = vsel %vm188, %v757, -inf
  %761 = vmax.xlane.f32.xlu0 %v760
  %v762 = vpop.xlane.xlu0 %761
  %v763 = vsub.f32 %v757, %v762
  %v764 = vmul.f32 %v763, 1.442695
  %v765 = vpow.pop %v764
  %v766 = vsel %vm188, %v765, 0.0
  %767 = vadd.xlane.f32.xlu0 %v766
  %v768 = vpop.xlane.xlu0 %767
  %v769 = vrcp.pop %v768
  %v770 = vmul.f32 %v765, %v769
  %v771 = vpack.c.bf16 %v770, %v770
  %v773 = vsel %vm188, %v771, 0
  %v776 = vsel %vm204, %v740, 0
  %778 = vmatpush.bf16.msra.mxu0 0
  %779 = vmatpush.bf16.msra.mxu0 0
  %780 = vmatpush.bf16.msra.mxu0 0
  %781 = vmatpush.bf16.msra.mxu0 0
  %782 = vmatpush.bf16.msra.mxu0 0
  %783 = vmatpush.bf16.msra.mxu0 0
  %784 = vmatpush.bf16.msra.mxu0 0
  %785 = vmatpush.bf16.msra.mxu0 %v776
  %786 = vmatmul.bf16.gmra.mxu0 %v773
  %v787 = vpop.f32.mrf.mxu0
  %v788 = vadd.f32 0.0, %v787
  %v789 = vpop.f32.mrf.mxu0
  %790 = vdwg.mxu0
  %v791 = vpack.c.bf16 %v788, %v788
  %v793 = vsel %vm96, %v791, 0
  %795 = vmatpush.bf16.msra.mxu0 0
  %796 = vmatpush.bf16.msra.mxu0 0
  %797 = vmatpush.bf16.msra.mxu0 0
  %798 = vmatpush.bf16.msra.mxu0 0
  %799 = vmatpush.bf16.msra.mxu0 0
  %800 = vmatpush.bf16.msra.mxu0 0
  %801 = vmatpush.bf16.msra.mxu0 0
  %802 = vmatpush.bf16.msra.mxu0 %v232
  %803 = vmatmul.bf16.gmra.mxu0 %v793
  %v804 = vpop.f32.mrf.mxu0
  %v805 = vadd.f32 %v226, %v804
  %v806 = vpop.f32.mrf.mxu0
  %807 = vdwg.mxu0
  %809 = vrot.lane.b32.xlu0 %v805, 32
  %v810 = vpop.permute.xlu0 %809
  %v812 = vadd.f32 %v80, %v810
  %814 = vrot.lane.b32.xlu0 %v812, 96
  %v815 = vpop.permute.xlu0 %814
  %v817 = vsel %vm96, %v815, 0.0
  %818 = vadd.xlane.f32.xlu0 %v817
  %v819 = vpop.xlane.xlu0 %818
  %v820 = vmul.f32 %v819, %v262
  %v821 = vsub.f32 %v812, %v820
  %v822 = vmul.f32 %v821, %v821
  %824 = vrot.lane.b32.xlu0 %v822, 96
  %v825 = vpop.permute.xlu0 %824
  %v827 = vsel %vm96, %v825, 0.0
  %828 = vadd.xlane.f32.xlu0 %v827
  %v829 = vpop.xlane.xlu0 %828
  %v830 = vmul.f32 %v829, %v262
  %v831 = vadd.f32 %v830, 1e-05
  %v832 = vrsqrt.pop %v831
  %v833 = vmul.f32 %v832, %v831
  %v834 = vmul.f32 %v833, %v832
  %v835 = vmul.f32 0.5, %v834
  %v836 = vsub.f32 1.5, %v835
  %v837 = vmul.f32 %v832, %v836
  %vm838 = vweird.f32 %v831
  %vm839 = vweird.f32 %v832
  %vm840 = vmor %vm838, %vm839
  %v841 = vsel %vm840, %v832, %v837
  %v842 = vmul.f32 %v821, %v841
  %843 = vrot.lane.b32.xlu0 %v283, 32
  %v844 = vpop.permute.xlu0 %843
  %v846 = vmul.f32 %v842, %v844
  %847 = vrot.lane.b32.xlu0 %v287, 32
  %v848 = vpop.permute.xlu0 %847
  %v850 = vadd.f32 %v846, %v848
  %v851 = vpack.c.bf16 %v850, %v850
  %853 = vrot.lane.b32.xlu0 %v851, 96
  %v854 = vpop.permute.xlu0 %853
  %v856 = vsel %vm96, %v854, 0
  %858 = vmatpush.bf16.msra.mxu0 0
  %859 = vmatpush.bf16.msra.mxu0 0
  %860 = vmatpush.bf16.msra.mxu0 0
  %861 = vmatpush.bf16.msra.mxu0 0
  %862 = vmatpush.bf16.msra.mxu0 0
  %863 = vmatpush.bf16.msra.mxu0 0
  %864 = vmatpush.bf16.msra.mxu0 0
  %865 = vmatpush.bf16.msra.mxu0 %v301
  %866 = vmatmul.bf16.gmra.mxu0 %v856
  %v867 = vpop.f32.mrf.mxu0
  %v868 = vadd.f32 %v295, %v867
  %v869 = vpop.f32.mrf.mxu0
  %870 = vdwg.mxu0
  %v871 = vmax.f32 %v868, 0.0
  %v872 = vpack.c.bf16 %v871, %v871
  %v874 = vsel %vm341, %v872, 0
  %876 = vmatpush.bf16.msra.mxu0 0
  %877 = vmatpush.bf16.msra.mxu0 0
  %878 = vmatpush.bf16.msra.mxu0 0
  %879 = vmatpush.bf16.msra.mxu0 0
  %880 = vmatpush.bf16.msra.mxu0 0
  %881 = vmatpush.bf16.msra.mxu0 0
  %882 = vmatpush.bf16.msra.mxu0 %v338
  %883 = vmatpush.bf16.msra.mxu0 %v337
  %884 = vmatmul.bf16.gmra.mxu0 %v874
  %v885 = vpop.f32.mrf.mxu0
  %v886 = vadd.f32 %v327, %v885
  %v887 = vpop.f32.mrf.mxu0
  %888 = vdwg.mxu0
  %890 = vrot.lane.b32.xlu0 %v886, 32
  %v891 = vpop.permute.xlu0 %890
  %v893 = vadd.f32 %v850, %v891
  %895 = vrot.lane.b32.xlu0 %v893, 96
  %v896 = vpop.permute.xlu0 %895
  %v898 = vsel %vm96, %v896, 0.0
  %899 = vadd.xlane.f32.xlu0 %v898
  %v900 = vpop.xlane.xlu0 %899
  %v901 = vmul.f32 %v900, %v262
  %v902 = vsub.f32 %v893, %v901
  %v903 = vmul.f32 %v902, %v902
  %905 = vrot.lane.b32.xlu0 %v903, 96
  %v906 = vpop.permute.xlu0 %905
  %v908 = vsel %vm96, %v906, 0.0
  %909 = vadd.xlane.f32.xlu0 %v908
  %v910 = vpop.xlane.xlu0 %909
  %v911 = vmul.f32 %v910, %v262
  %v912 = vadd.f32 %v911, 1e-05
  %v913 = vrsqrt.pop %v912
  %v914 = vmul.f32 %v913, %v912
  %v915 = vmul.f32 %v914, %v913
  %v916 = vmul.f32 0.5, %v915
  %v917 = vsub.f32 1.5, %v916
  %v918 = vmul.f32 %v913, %v917
  %vm919 = vweird.f32 %v912
  %vm920 = vweird.f32 %v913
  %vm921 = vmor %vm919, %vm920
  %v922 = vsel %vm921, %v913, %v918
  %v923 = vmul.f32 %v902, %v922
  %924 = vrot.lane.b32.xlu0 %v384, 32
  %v925 = vpop.permute.xlu0 %924
  %v927 = vmul.f32 %v923, %v925
  %928 = vrot.lane.b32.xlu0 %v388, 32
  %v929 = vpop.permute.xlu0 %928
  %v931 = vadd.f32 %v927, %v929
  %v932 = vpack.c.bf16 %v931, %v931
  %v933 = vld [vmem:[%s18 + $0x10] sm:$0xf]
  %v934 = vld [vmem:[%s18 + $0x14] sm:$0xf]
  %936 = vrot.lane.b32.xlu0 %v932, 96
  %v937 = vpop.permute.xlu0 %936
  %v940 = vunpack.c.l.b16 %v933
  %v941 = vunpack.c.l.b16 %v934
  %v942 = vpack.c.b16 %v941, %v940
  %v945 = vsel %vm96, %v937, 0
  %947 = vmatpush.bf16.msra.mxu0 0
  %948 = vmatpush.bf16.msra.mxu0 0
  %949 = vmatpush.bf16.msra.mxu0 0
  %950 = vmatpush.bf16.msra.mxu0 0
  %951 = vmatpush.bf16.msra.mxu0 0
  %952 = vmatpush.bf16.msra.mxu0 0
  %953 = vmatpush.bf16.msra.mxu0 0
  %954 = vmatpush.bf16.msra.mxu0 %v942
  %955 = vmatmul.bf16.gmra.mxu0 %v945
  %v956 = vpop.f32.mrf.mxu0
  %v957 = vadd.f32 0.0, %v956
  %v958 = vpop.f32.mrf.mxu0
  %959 = vdwg.mxu0
  %v960 = vadd.f32 %v686, %v957
  %961 = vrot.lane.b32.xlu0 %v82, 80
  %v962 = vpop.permute.xlu0 %961
  %v964 = vsel %vm96, %v962, 0
  %966 = vmatpush.bf16.msra.mxu0 0
  %967 = vmatpush.bf16.msra.mxu0 0
  %968 = vmatpush.bf16.msra.mxu0 0
  %969 = vmatpush.bf16.msra.mxu0 0
  %970 = vmatpush.bf16.msra.mxu0 0
  %971 = vmatpush.bf16.msra.mxu0 0
  %972 = vmatpush.bf16.msra.mxu0 0
  %973 = vmatpush.bf16.msra.mxu0 %v94
  %974 = vmatmul.bf16.gmra.mxu0 %v964
  %v975 = vpop.f32.mrf.mxu0
  %v976 = vadd.f32 %v88, %v975
  %v977 = vpop.f32.mrf.mxu0
  %978 = vdwg.mxu0
  %v979 = vpack.c.bf16 %v976, %v976
  %980 = vrot.lane.b32.xlu0 %v83, 80
  %v981 = vpop.permute.xlu0 %980
  %v983 = vsel %vm96, %v981, 0
  %985 = vmatpush.bf16.msra.mxu0 0
  %986 = vmatpush.bf16.msra.mxu0 0
  %987 = vmatpush.bf16.msra.mxu0 0
  %988 = vmatpush.bf16.msra.mxu0 0
  %989 = vmatpush.bf16.msra.mxu0 0
  %990 = vmatpush.bf16.msra.mxu0 0
  %991 = vmatpush.bf16.msra.mxu0 0
  %992 = vmatpush.bf16.msra.mxu0 %v124
  %993 = vmatmul.bf16.gmra.mxu0 %v983
  %v994 = vpop.f32.mrf.mxu0
  %v995 = vadd.f32 %v118, %v994
  %v996 = vpop.f32.mrf.mxu0
  %997 = vdwg.mxu0
  %v998 = vpack.c.bf16 %v995, %v995
  %999 = vmatpush.bf16.msra.mxu0 0
  %1000 = vmatpush.bf16.msra.mxu0 0
  %1001 = vmatpush.bf16.msra.mxu0 0
  %1002 = vmatpush.bf16.msra.mxu0 0
  %1003 = vmatpush.bf16.msra.mxu0 0
  %1004 = vmatpush.bf16.msra.mxu0 0
  %1005 = vmatpush.bf16.msra.mxu0 0
  %1006 = vmatpush.bf16.msra.mxu0 %v153
  %1007 = vmatmul.bf16.gmra.mxu0 %v983
  %v1008 = vpop.f32.mrf.mxu0
  %v1009 = vadd.f32 %v147, %v1008
  %v1010 = vpop.f32.mrf.mxu0
  %1011 = vdwg.mxu0
  %v1012 = vpack.c.bf16 %v1009, %v1009
  %v1014 = vsel %vm96, %v979, 0
  %v1017 = vsel %vm96, %v998, 0
  %1019 = vmatpush.bf16.xpose.msra.mxu0 0
  %1020 = vmatpush.bf16.xpose.msra.mxu0 0
  %1021 = vmatpush.bf16.xpose.msra.mxu0 0
  %1022 = vmatpush.bf16.xpose.msra.mxu0 0
  %1023 = vmatpush.bf16.xpose.msra.mxu0 0
  %1024 = vmatpush.bf16.xpose.msra.mxu0 0
  %1025 = vmatpush.bf16.xpose.msra.mxu0 0
  %1026 = vmatpush.bf16.xpose.msra.mxu0 %v1017
  %1027 = vmatmul.bf16.gmra.mxu0 %v1014
  %v1028 = vpop.f32.mrf.mxu0
  %v1029 = vadd.f32 0.0, %v1028
  %v1030 = vpop.f32.mrf.mxu0
  %1031 = vdwg.mxu0
  %v1032 = vsel %vm188, %v1029, -inf
  %1033 = vmax.xlane.f32.xlu0 %v1032
  %v1034 = vpop.xlane.xlu0 %1033
  %v1035 = vsub.f32 %v1029, %v1034
  %v1036 = vmul.f32 %v1035, 1.442695
  %v1037 = vpow.pop %v1036
  %v1038 = vsel %vm188, %v1037, 0.0
  %1039 = vadd.xlane.f32.xlu0 %v1038
  %v1040 = vpop.xlane.xlu0 %1039
  %v1041 = vrcp.pop %v1040
  %v1042 = vmul.f32 %v1037, %v1041
  %v1043 = vpack.c.bf16 %v1042, %v1042
  %v1045 = vsel %vm188, %v1043, 0
  %v1048 = vsel %vm204, %v1012, 0
  %1050 = vmatpush.bf16.msra.mxu0 0
  %1051 = vmatpush.bf16.msra.mxu0 0
  %1052 = vmatpush.bf16.msra.mxu0 0
  %1053 = vmatpush.bf16.msra.mxu0 0
  %1054 = vmatpush.bf16.msra.mxu0 0
  %1055 = vmatpush.bf16.msra.mxu0 0
  %1056 = vmatpush.bf16.msra.mxu0 0
  %1057 = vmatpush.bf16.msra.mxu0 %v1048
  %1058 = vmatmul.bf16.gmra.mxu0 %v1045
  %v1059 = vpop.f32.mrf.mxu0
  %v1060 = vadd.f32 0.0, %v1059
  %v1061 = vpop.f32.mrf.mxu0
  %1062 = vdwg.mxu0
  %v1063 = vpack.c.bf16 %v1060, %v1060
  %v1065 = vsel %vm96, %v1063, 0
  %1067 = vmatpush.bf16.msra.mxu0 0
  %1068 = vmatpush.bf16.msra.mxu0 0
  %1069 = vmatpush.bf16.msra.mxu0 0
  %1070 = vmatpush.bf16.msra.mxu0 0
  %1071 = vmatpush.bf16.msra.mxu0 0
  %1072 = vmatpush.bf16.msra.mxu0 0
  %1073 = vmatpush.bf16.msra.mxu0 0
  %1074 = vmatpush.bf16.msra.mxu0 %v232
  %1075 = vmatmul.bf16.gmra.mxu0 %v1065
  %v1076 = vpop.f32.mrf.mxu0
  %v1077 = vadd.f32 %v226, %v1076
  %v1078 = vpop.f32.mrf.mxu0
  %1079 = vdwg.mxu0
  %1081 = vrot.lane.b32.xlu0 %v1077, 48
  %v1082 = vpop.permute.xlu0 %1081
  %v1084 = vadd.f32 %v80, %v1082
  %1086 = vrot.lane.b32.xlu0 %v1084, 80
  %v1087 = vpop.permute.xlu0 %1086
  %v1089 = vsel %vm96, %v1087, 0.0
  %1090 = vadd.xlane.f32.xlu0 %v1089
  %v1091 = vpop.xlane.xlu0 %1090
  %v1092 = vmul.f32 %v1091, %v262
  %v1093 = vsub.f32 %v1084, %v1092
  %v1094 = vmul.f32 %v1093, %v1093
  %1096 = vrot.lane.b32.xlu0 %v1094, 80
  %v1097 = vpop.permute.xlu0 %1096
  %v1099 = vsel %vm96, %v1097, 0.0
  %1100 = vadd.xlane.f32.xlu0 %v1099
  %v1101 = vpop.xlane.xlu0 %1100
  %v1102 = vmul.f32 %v1101, %v262
  %v1103 = vadd.f32 %v1102, 1e-05
  %v1104 = vrsqrt.pop %v1103
  %v1105 = vmul.f32 %v1104, %v1103
  %v1106 = vmul.f32 %v1105, %v1104
  %v1107 = vmul.f32 0.5, %v1106
  %v1108 = vsub.f32 1.5, %v1107
  %v1109 = vmul.f32 %v1104, %v1108
  %vm1110 = vweird.f32 %v1103
  %vm1111 = vweird.f32 %v1104
  %vm1112 = vmor %vm1110, %vm1111
  %v1113 = vsel %vm1112, %v1104, %v1109
  %v1114 = vmul.f32 %v1093, %v1113
  %1115 = vrot.lane.b32.xlu0 %v283, 48
  %v1116 = vpop.permute.xlu0 %1115
  %v1118 = vmul.f32 %v1114, %v1116
  %1119 = vrot.lane.b32.xlu0 %v287, 48
  %v1120 = vpop.permute.xlu0 %1119
  %v1122 = vadd.f32 %v1118, %v1120
  %v1123 = vpack.c.bf16 %v1122, %v1122
  %1125 = vrot.lane.b32.xlu0 %v1123, 80
  %v1126 = vpop.permute.xlu0 %1125
  %v1128 = vsel %vm96, %v1126, 0
  %1130 = vmatpush.bf16.msra.mxu0 0
  %1131 = vmatpush.bf16.msra.mxu0 0
  %1132 = vmatpush.bf16.msra.mxu0 0
  %1133 = vmatpush.bf16.msra.mxu0 0
  %1134 = vmatpush.bf16.msra.mxu0 0
  %1135 = vmatpush.bf16.msra.mxu0 0
  %1136 = vmatpush.bf16.msra.mxu0 0
  %1137 = vmatpush.bf16.msra.mxu0 %v301
  %1138 = vmatmul.bf16.gmra.mxu0 %v1128
  %v1139 = vpop.f32.mrf.mxu0
  %v1140 = vadd.f32 %v295, %v1139
  %v1141 = vpop.f32.mrf.mxu0
  %1142 = vdwg.mxu0
  %v1143 = vmax.f32 %v1140, 0.0
  %v1144 = vpack.c.bf16 %v1143, %v1143
  %v1146 = vsel %vm341, %v1144, 0
  %1148 = vmatpush.bf16.msra.mxu0 0
  %1149 = vmatpush.bf16.msra.mxu0 0
  %1150 = vmatpush.bf16.msra.mxu0 0
  %1151 = vmatpush.bf16.msra.mxu0 0
  %1152 = vmatpush.bf16.msra.mxu0 0
  %1153 = vmatpush.bf16.msra.mxu0 0
  %1154 = vmatpush.bf16.msra.mxu0 %v338
  %1155 = vmatpush.bf16.msra.mxu0 %v337
  %1156 = vmatmul.bf16.gmra.mxu0 %v1146
  %v1157 = vpop.f32.mrf.mxu0
  %v1158 = vadd.f32 %v327, %v1157
  %v1159 = vpop.f32.mrf.mxu0
  %1160 = vdwg.mxu0
  %1162 = vrot.lane.b32.xlu0 %v1158, 48
  %v1163 = vpop.permute.xlu0 %1162
  %v1165 = vadd.f32 %v1122, %v1163
  %1167 = vrot.lane.b32.xlu0 %v1165, 80
  %v1168 = vpop.permute.xlu0 %1167
  %v1170 = vsel %vm96, %v1168, 0.0
  %1171 = vadd.xlane.f32.xlu0 %v1170
  %v1172 = vpop.xlane.xlu0 %1171
  %v1173 = vmul.f32 %v1172, %v262
  %v1174 = vsub.f32 %v1165, %v1173
  %v1175 = vmul.f32 %v1174, %v1174
  %1177 = vrot.lane.b32.xlu0 %v1175, 80
  %v1178 = vpop.permute.xlu0 %1177
  %v1180 = vsel %vm96, %v1178, 0.0
  %1181 = vadd.xlane.f32.xlu0 %v1180
  %v1182 = vpop.xlane.xlu0 %1181
  %v1183 = vmul.f32 %v1182, %v262
  %v1184 = vadd.f32 %v1183, 1e-05
  %v1185 = vrsqrt.pop %v1184
  %v1186 = vmul.f32 %v1185, %v1184
  %v1187 = vmul.f32 %v1186, %v1185
  %v1188 = vmul.f32 0.5, %v1187
  %v1189 = vsub.f32 1.5, %v1188
  %v1190 = vmul.f32 %v1185, %v1189
  %vm1191 = vweird.f32 %v1184
  %vm1192 = vweird.f32 %v1185
  %vm1193 = vmor %vm1191, %vm1192
  %v1194 = vsel %vm1193, %v1185, %v1190
  %v1195 = vmul.f32 %v1174, %v1194
  %1196 = vrot.lane.b32.xlu0 %v384, 48
  %v1197 = vpop.permute.xlu0 %1196
  %v1199 = vmul.f32 %v1195, %v1197
  %1200 = vrot.lane.b32.xlu0 %v388, 48
  %v1201 = vpop.permute.xlu0 %1200
  %v1203 = vadd.f32 %v1199, %v1201
  %v1204 = vpack.c.bf16 %v1203, %v1203
  %v1205 = vld [vmem:[%s18 + $0x18] sm:$0xf]
  %v1206 = vld [vmem:[%s18 + $0x1c] sm:$0xf]
  %1208 = vrot.lane.b32.xlu0 %v1204, 80
  %v1209 = vpop.permute.xlu0 %1208
  %v1212 = vunpack.c.l.b16 %v1205
  %v1213 = vunpack.c.l.b16 %v1206
  %v1214 = vpack.c.b16 %v1213, %v1212
  %v1217 = vsel %vm96, %v1209, 0
  %1219 = vmatpush.bf16.msra.mxu0 0
  %1220 = vmatpush.bf16.msra.mxu0 0
  %1221 = vmatpush.bf16.msra.mxu0 0
  %1222 = vmatpush.bf16.msra.mxu0 0
  %1223 = vmatpush.bf16.msra.mxu0 0
  %1224 = vmatpush.bf16.msra.mxu0 0
  %1225 = vmatpush.bf16.msra.mxu0 0
  %1226 = vmatpush.bf16.msra.mxu0 %v1214
  %1227 = vmatmul.bf16.gmra.mxu0 %v1217
  %v1228 = vpop.f32.mrf.mxu0
  %v1229 = vadd.f32 0.0, %v1228
  %v1230 = vpop.f32.mrf.mxu0
  %1231 = vdwg.mxu0
  %v1232 = vadd.f32 %v960, %v1229
  %v1233 = vld [vmem:[%s19] sm:$0x1]
  %v1235 = vperm.slane %v1233, 0
  %v1237 = vadd.f32 %v1232, %v1235
  %v1238 = vld [vmem:[%s20] sm:$0x1]
  %v1240 = vperm.slane %v1238, 0
  %v1242 = vmul.f32 %v1237, %v1240
  %v1243 = vld [vmem:[%s21] sm:$0x1]
  %v1245 = vperm.slane %v1243, 0
  %v1247 = vadd.f32 %v1242, %v1245
  %v1248 = vmax.f32 %v1247, 0.0
  %v1249 = vld [vmem:[%s22] sm:$0x1]
  %v1251 = vperm.slane %v1249, 0
  %v1253 = vmul.f32 %v1248, %v1251
  %vm1254 = vcmask 523264
  %v1255 = vsel %vm1254, %v1253, 0.0
  %1256 = vadd.xlane.f32.xlu0 %v1255
  %v1257 = vpop.xlane.xlu0 %1256
  %v1258 = vld [vmem:[#allocation2] sm:$0x1]
  %v1260 = vperm.slane %v1258, 0
  %v1262 = vadd.f32 %v1257, %v1260
  %v1263 = vsub.f32 0.0, %v1262
  %v1264 = vmul.f32 %v1263, 1.442695
  %v1265 = vpow.pop %v1264
  %v1266 = vadd.f32 %v1265, 1.0
  %v1267 = vrcp.pop %v1266
  %vm1268 = vcmask 7168
  %1269 = vst.msk [vmem:[%s24] sm:$0xff] %vm1268, %v1267
  // Predicated region
  $region98: #{time_series_encoder_classifier.1} parent=0 // pred_check
    _
  $region99: #{time_series_encoder_classifier.1} parent=0 // pred_check_branch
    %1271 = sbr.rel (0) target = $region101
  $region100: #{time_series_encoder_classifier.1} parent=0 // pred_region
    _
  $region101: #{time_series_encoder_classifier.1} parent=0 // pred_fallthru
    _
  // Predicated region
  $region102: #{time_series_encoder_classifier.1} parent=0 // pred_check
    _
  $region103: #{time_series_encoder_classifier.1} parent=0 // pred_check_branch
    %1273 = sbr.rel (0) target = $region105
  $region104: #{time_series_encoder_classifier.1} parent=0 // pred_region
    _
  $region105: #{time_series_encoder_classifier.1} parent=0 // pred_fallthru
    _

</llo_original>
